<compile_context>
chip_gen: v7x
topology: tpu7x:2x2x1
jax: 0.10.0
libtpu: 0.0.40
codegen_flags: <defaults>
</compile_context>

<pallas_src>
import jax
import jax.numpy as jnp
from jax import lax
from jax.experimental import pallas as pl
from jax.experimental.pallas import tpu as pltpu


def _round_up(x, m):
    return (x + m - 1) // m * m


def _pad_gates(w, h, hp):
    """(K, 4h) -> (K, 4hp): pad each of the 4 gate blocks from h to hp columns."""
    if hp == h:
        return w
    k = w.shape[0]
    w4 = w.reshape(k, 4, h)
    w4 = jnp.pad(w4, ((0, 0), (0, 0), (0, hp - h)))
    return w4.reshape(k, 4 * hp)


# ---------------------------------------------------------------------------
# Fused kernel: all LSTM layers + FC head for one batch tile.
# ---------------------------------------------------------------------------
def _make_fused_kernel(num_layers, seq_len, b_tile, unroll):
    def kernel(x_ref, *rest):
        layer_refs = rest[:3 * num_layers]
        fcw_ref, fcb_ref, out_ref, gx_scr, hseq_scr = rest[3 * num_layers:]
        hp = hseq_scr.shape[-1]          # padded hidden size (multiple of 128)
        B = b_tile
        T = seq_len

        h_last = None
        for layer in range(num_layers):
            wih_ref = layer_refs[3 * layer + 0]
            whh_ref = layer_refs[3 * layer + 1]
            b_ref = layer_refs[3 * layer + 2]

            # ---- hoisted input projection: ONE big MXU matmul per layer ----
            seq_in = x_ref[...] if layer == 0 else hseq_scr[...]   # (T*B, Din)
            gx_scr[...] = (
                jnp.dot(seq_in, wih_ref[...],
                        preferred_element_type=jnp.float32)
                + b_ref[...])                                      # (T*B, 4Hp)

            whh = whh_ref[...]                                     # (Hp, 4Hp)
            write_seq = layer < num_layers - 1    # last layer: only h_last used

            # ---- serial time recurrence: only h @ W_hh^T on the hot path ----
            def step(t, carry):
                h, c = carry
                row = pl.multiple_of(t * B, B)
                g = gx_scr[pl.ds(row, B), :] + jnp.dot(
                    h, whh, preferred_element_type=jnp.float32)
                # Gate order [i, f, g, o]; slices are 128-aligned (free views).
                i_g = jax.nn.sigmoid(g[:, 0 * hp:1 * hp])
                f_g = jax.nn.sigmoid(g[:, 1 * hp:2 * hp])
                g_g = jnp.tanh(g[:, 2 * hp:3 * hp])
                o_g = jax.nn.sigmoid(g[:, 3 * hp:4 * hp])
                c_new = f_g * c + i_g * g_g
                h_new = o_g * jnp.tanh(c_new)
                if write_seq:
                    hseq_scr[pl.ds(row, B), :] = h_new
                return (h_new, c_new)

            h0 = jnp.zeros((B, hp), jnp.float32)
            c0 = jnp.zeros((B, hp), jnp.float32)
            h_last, _ = lax.fori_loop(0, T, step, (h0, c0), unroll=unroll)

        # ---- fused FC head on the final hidden state (lane-dense store) ----
        out_ref[...] = (
            jnp.dot(h_last, fcw_ref[...], preferred_element_type=jnp.float32)
            + fcb_ref[...])

    return kernel


# ---------------------------------------------------------------------------
# Wrapper: padding / layout prep + pallas_call (matches MyLSTMModel.forward).
# ---------------------------------------------------------------------------
def my_lstm_model_forward(x_btd, params):
    """x_btd: (B, T, input_size) batch-first -> (B, output_size)."""
    B, T, D = x_btd.shape
    lstm = params["lstm"]
    num_layers = len(lstm)
    H = lstm[0][1].shape[1]
    O = params["fc_w"].shape[0]
    f32 = jnp.float32

    # MXU / vreg friendly padded sizes.
    Dp = _round_up(D, 128)
    Hp = _round_up(H, 128)
    Op = _round_up(O, 128)
    if B <= 256:
        b_tile = _round_up(B, 8)
        B_pad = b_tile
    else:
        b_tile = 256
        B_pad = _round_up(B, b_tile)
    n_btiles = B_pad // b_tile

    # Input: time-major, zero-padded, grouped into batch tiles so the kernel
    # always works on 2-D (T*b_tile, Dp) slabs (no in-kernel reshape needed).
    x_tm = jnp.zeros((T, B_pad, Dp), f32).at[:, :B, :D].set(
        jnp.transpose(x_btd.astype(f32), (1, 0, 2)))
    x_tiles = (x_tm.reshape(T, n_btiles, b_tile, Dp)
               .transpose(1, 0, 2, 3)
               .reshape(n_btiles, T * b_tile, Dp))

    # Weights: transposed + zero-padded; each gate occupies a 128-aligned range.
    flat_weights = []
    in_specs = [pl.BlockSpec((None, T * b_tile, Dp), lambda b: (b, 0, 0))]
    for idx, (w_ih, w_hh, b_ih, b_hh) in enumerate(lstm):
        d_in = w_ih.shape[1]
        d_in_p = Dp if idx == 0 else Hp
        wih_t = jnp.zeros((d_in_p, 4 * H), f32).at[:d_in, :].set(w_ih.T)
        whh_t = jnp.zeros((Hp, 4 * H), f32).at[:H, :].set(w_hh.T)
        wih_p = _pad_gates(wih_t, H, Hp)                    # (d_in_p, 4Hp)
        whh_p = _pad_gates(whh_t, H, Hp)                    # (Hp,     4Hp)
        bias_p = _pad_gates((b_ih + b_hh)[None, :], H, Hp)  # (1,      4Hp)
        flat_weights += [wih_p, whh_p, bias_p]
        in_specs += [
            pl.BlockSpec((d_in_p, 4 * Hp), lambda b: (0, 0)),   # resident
            pl.BlockSpec((Hp, 4 * Hp), lambda b: (0, 0)),       # resident
            pl.BlockSpec((1, 4 * Hp), lambda b: (0, 0)),        # resident
        ]
    fcw_p = jnp.zeros((Hp, Op), f32).at[:H, :O].set(params["fc_w"].T)
    fcb_p = jnp.zeros((1, Op), f32).at[0, :O].set(params["fc_b"])
    flat_weights += [fcw_p, fcb_p]
    in_specs += [pl.BlockSpec((Hp, Op), lambda b: (0, 0)),
                 pl.BlockSpec((1, Op), lambda b: (0, 0))]

    # Explicit VMEM budget (BlockSpec inputs are double-buffered).
    block_bytes = 4 * (T * b_tile * Dp + b_tile * Op)
    weight_bytes = sum(4 * w.size for w in flat_weights)
    scratch_bytes = 4 * (T * b_tile * 4 * Hp + T * b_tile * Hp)
    vmem_limit = int(min(2 * (block_bytes + weight_bytes) + scratch_bytes
                         + (4 << 20), 64 * 1024 * 1024))

    unroll = True if T <= 16 else 8
    kernel = _make_fused_kernel(num_layers, T, b_tile, unroll)

    out_pad = pl.pallas_call(
        kernel,
        out_shape=jax.ShapeDtypeStruct((B_pad, Op), f32),
        grid=(n_btiles,),
        in_specs=in_specs,
        out_specs=pl.BlockSpec((b_tile, Op), lambda b: (b, 0)),
        scratch_shapes=[
            pltpu.VMEM((T * b_tile, 4 * Hp), f32),  # precomputed input gates
            pltpu.VMEM((T * b_tile, Hp), f32),      # hidden seq (layer -> layer)
        ],
        compiler_params=pltpu.CompilerParams(
            dimension_semantics=("parallel",),      # batch tiles are independent
            vmem_limit_bytes=vmem_limit),
    )(x_tiles, *flat_weights)

    return out_pad[:B, :O]


# ---------------------------------------------------------------------------
# Parameter init mirroring PyTorch nn.LSTM / nn.Linear shapes & init ranges.
# ---------------------------------------------------------------------------
def init_params(key, input_size, hidden_size, output_size, num_layers):
    k = 1.0 / float(hidden_size) ** 0.5
    layers = []
    for layer in range(num_layers):
        d_in = input_size if layer == 0 else hidden_size
        key, k1, k2, k3, k4 = jax.random.split(key, 5)
        layers.append((
            jax.random.uniform(k1, (4 * hidden_size, d_in), jnp.float32, -k, k),
            jax.random.uniform(k2, (4 * hidden_size, hidden_size), jnp.float32, -k, k),
            jax.random.uniform(k3, (4 * hidden_size,), jnp.float32, -k, k),
            jax.random.uniform(k4, (4 * hidden_size,), jnp.float32, -k, k),
        ))
    key, k5, k6 = jax.random.split(key, 3)
    fc_w = jax.random.uniform(k5, (output_size, hidden_size), jnp.float32, -k, k)
    fc_b = jax.random.uniform(k6, (output_size,), jnp.float32, -k, k)
    return {"lstm": layers, "fc_w": fc_w, "fc_b": fc_b}


# ---------------------------------------------------------------------------
# Pure-JAX reference (mirrors the PyTorch module) for correctness checking.
# ---------------------------------------------------------------------------
def reference_forward(x_btd, params):
    B = x_btd.shape[0]
    h_seq = x_btd.astype(jnp.float32)                       # (B, T, D)
    for (w_ih, w_hh, b_ih, b_hh) in params["lstm"]:
        H = w_hh.shape[1]

        def step(carry, x_t):
            h, c = carry
            g = x_t @ w_ih.T + h @ w_hh.T + b_ih + b_hh
            i = jax.nn.sigmoid(g[:, 0 * H:1 * H])
            f = jax.nn.sigmoid(g[:, 1 * H:2 * H])
            gg = jnp.tanh(g[:, 2 * H:3 * H])
            o = jax.nn.sigmoid(g[:, 3 * H:4 * H])
            c = f * c + i * gg
            h = o * jnp.tanh(c)
            return (h, c), h

        init = (jnp.zeros((B, H), jnp.float32), jnp.zeros((B, H), jnp.float32))
        (_, _), hs = lax.scan(step, init, jnp.transpose(h_seq, (1, 0, 2)))
        h_seq = jnp.transpose(hs, (1, 0, 2))
    return h_seq[:, -1, :] @ params["fc_w"].T + params["fc_b"]


if __name__ == "__main__":
    batch, seq_len = 2, 8
    input_size, hidden_size, output_size = 16, 32, 8

    key = jax.random.PRNGKey(0)
    fwd = jax.jit(my_lstm_model_forward)

    for num_layers in (1, 2):
        key, kx, kp = jax.random.split(key, 3)
        x = jax.random.normal(kx, (batch, seq_len, input_size), jnp.float32)
        params = init_params(kp, input_size, hidden_size, output_size, num_layers)

        out = jax.block_until_ready(fwd(x, params))
        assert out.shape == (batch, output_size)

        ref = reference_forward(x, params)
        assert jnp.allclose(out, ref, atol=1e-4, rtol=1e-4), \
            f"mismatch vs reference (num_layers={num_layers})"

    print("KERNEL_OK")
</pallas_src>

<mosaic_0001>
module attributes {stable_mosaic.version = 11 : i64} {
  func.func @kernel(%arg0: i32, %arg1: memref<1x64x128xf32, #tpu.memory_space<vmem>>, %arg2: memref<128x512xf32, #tpu.memory_space<vmem>>, %arg3: memref<128x512xf32, #tpu.memory_space<vmem>>, %arg4: memref<1x512xf32, #tpu.memory_space<vmem>>, %arg5: memref<128x128xf32, #tpu.memory_space<vmem>>, %arg6: memref<1x128xf32, #tpu.memory_space<vmem>>, %arg7: memref<8x128xf32, #tpu.memory_space<vmem>>, %arg8: memref<64x512xf32, #tpu.memory_space<vmem>>, %arg9: memref<64x128xf32, #tpu.memory_space<vmem>>) attributes {dimension_semantics = [#tpu.dimension_semantics<parallel>], iteration_bounds = array<i64: 1>, scalar_prefetch = 0 : i64, scratch_operands = 2 : i64, tpu.core_type = #tpu.core_type<tc>, window_params = [{transform_indices = @transform_0, window_bounds = array<i64: 1, 64, 128>}, {pipeline_mode = #tpu.pipeline_mode<synchronous>, transform_indices = @transform_1, window_bounds = array<i64: 128, 512>}, {pipeline_mode = #tpu.pipeline_mode<synchronous>, transform_indices = @transform_2, window_bounds = array<i64: 128, 512>}, {pipeline_mode = #tpu.pipeline_mode<synchronous>, transform_indices = @transform_3, window_bounds = array<i64: 1, 512>}, {pipeline_mode = #tpu.pipeline_mode<synchronous>, transform_indices = @transform_4, window_bounds = array<i64: 128, 128>}, {pipeline_mode = #tpu.pipeline_mode<synchronous>, transform_indices = @transform_5, window_bounds = array<i64: 1, 128>}, {transform_indices = @transform_6, window_bounds = array<i64: 8, 128>}]} {
    %c0 = arith.constant 0 : index
    %c0_0 = arith.constant 0 : index
    %c0_1 = arith.constant 0 : index
    %0 = vector.load %arg1[%c0, %c0_0, %c0_1] : memref<1x64x128xf32, #tpu.memory_space<vmem>>, vector<1x64x128xf32>
    %1 = vector.shape_cast %0 : vector<1x64x128xf32> to vector<64x128xf32>
    %c0_2 = arith.constant 0 : index
    %c0_3 = arith.constant 0 : index
    %2 = vector.load %arg2[%c0_2, %c0_3] : memref<128x512xf32, #tpu.memory_space<vmem>>, vector<128x512xf32>
    %cst = arith.constant dense<0.000000e+00> : vector<64x512xf32>
    %3 = tpu.matmul %1, %2, %cst {dimension_numbers = #tpu.dot_dimension_numbers<[1], [0], [0], [1], [0, 0, 1, 1], [], []>} : vector<64x128xf32>, vector<128x512xf32>, vector<64x512xf32> -> vector<64x512xf32>
    %c0_4 = arith.constant 0 : index
    %c0_5 = arith.constant 0 : index
    %4 = vector.load %arg4[%c0_4, %c0_5] : memref<1x512xf32, #tpu.memory_space<vmem>>, vector<1x512xf32>
    %5 = vector.broadcast %4 : vector<1x512xf32> to vector<64x512xf32>
    %6 = arith.addf %3, %5 : vector<64x512xf32>
    %c0_6 = arith.constant 0 : index
    %c0_7 = arith.constant 0 : index
    %7 = vector.load %arg8[%c0_6, %c0_7] : memref<64x512xf32, #tpu.memory_space<vmem>>, vector<64x512xf32>
    tpu.vector_store %arg8[%c0_6, %c0_7], %6 {strides = array<i32>} : memref<64x512xf32, #tpu.memory_space<vmem>>, vector<64x512xf32>,
    %c0_8 = arith.constant 0 : index
    %c0_9 = arith.constant 0 : index
    %8 = vector.load %arg3[%c0_8, %c0_9] : memref<128x512xf32, #tpu.memory_space<vmem>>, vector<128x512xf32>
    %cst_10 = arith.constant 0.000000e+00 : f32
    %9 = vector.broadcast %cst_10 : f32 to vector<8x128xf32>
    %cst_11 = arith.constant 0.000000e+00 : f32
    %10 = vector.broadcast %cst_11 : f32 to vector<8x128xf32>
    %c0_i32 = arith.constant 0 : i32
    %c8_i32 = arith.constant 8 : i32
    %11 = arith.muli %c0_i32, %c8_i32 : i32
    %12 = tpu.assume_multiple %11, 8 : i32
    %13 = arith.index_cast %12 : i32 to index
    %c0_12 = arith.constant 0 : index
    %14 = vector.load %arg8[%13, %c0_12] : memref<64x512xf32, #tpu.memory_space<vmem>>, vector<8x512xf32>
    %cst_13 = arith.constant dense<0.000000e+00> : vector<8x512xf32>
    %15 = tpu.matmul %9, %8, %cst_13 {dimension_numbers = #tpu.dot_dimension_numbers<[1], [0], [0], [1], [0, 0, 1, 1], [], []>} : vector<8x128xf32>, vector<128x512xf32>, vector<8x512xf32> -> vector<8x512xf32>
    %16 = arith.addf %14, %15 : vector<8x512xf32>
    %17 = vector.extract_strided_slice %16 {offsets = [0, 0], sizes = [8, 128], strides = [1, 1]} : vector<8x512xf32> to vector<8x128xf32>
    %18 = arith.negf %17 : vector<8x128xf32>
    %19 = math.exp %18 : vector<8x128xf32>
    %cst_14 = arith.constant 1.000000e+00 : f32
    %20 = vector.broadcast %cst_14 : f32 to vector<8x128xf32>
    %21 = arith.addf %20, %19 : vector<8x128xf32>
    %22 = arith.divf %20, %21 : vector<8x128xf32>
    %23 = vector.extract_strided_slice %16 {offsets = [0, 128], sizes = [8, 128], strides = [1, 1]} : vector<8x512xf32> to vector<8x128xf32>
    %24 = arith.negf %23 : vector<8x128xf32>
    %25 = math.exp %24 : vector<8x128xf32>
    %cst_15 = arith.constant 1.000000e+00 : f32
    %26 = vector.broadcast %cst_15 : f32 to vector<8x128xf32>
    %27 = arith.addf %26, %25 : vector<8x128xf32>
    %28 = arith.divf %26, %27 : vector<8x128xf32>
    %29 = vector.extract_strided_slice %16 {offsets = [0, 256], sizes = [8, 128], strides = [1, 1]} : vector<8x512xf32> to vector<8x128xf32>
    %30 = math.tanh %29 : vector<8x128xf32>
    %31 = vector.extract_strided_slice %16 {offsets = [0, 384], sizes = [8, 128], strides = [1, 1]} : vector<8x512xf32> to vector<8x128xf32>
    %32 = arith.negf %31 : vector<8x128xf32>
    %33 = math.exp %32 : vector<8x128xf32>
    %cst_16 = arith.constant 1.000000e+00 : f32
    %34 = vector.broadcast %cst_16 : f32 to vector<8x128xf32>
    %35 = arith.addf %34, %33 : vector<8x128xf32>
    %36 = arith.divf %34, %35 : vector<8x128xf32>
    %37 = arith.mulf %28, %10 : vector<8x128xf32>
    %38 = arith.mulf %22, %30 : vector<8x128xf32>
    %39 = arith.addf %37, %38 : vector<8x128xf32>
    %40 = math.tanh %39 : vector<8x128xf32>
    %41 = arith.mulf %36, %40 : vector<8x128xf32>
    %c1_i32 = arith.constant 1 : i32
    %c8_i32_17 = arith.constant 8 : i32
    %42 = arith.muli %c1_i32, %c8_i32_17 : i32
    %43 = tpu.assume_multiple %42, 8 : i32
    %44 = arith.index_cast %43 : i32 to index
    %c0_18 = arith.constant 0 : index
    %45 = vector.load %arg8[%44, %c0_18] : memref<64x512xf32, #tpu.memory_space<vmem>>, vector<8x512xf32>
    %cst_19 = arith.constant dense<0.000000e+00> : vector<8x512xf32>
    %46 = tpu.matmul %41, %8, %cst_19 {dimension_numbers = #tpu.dot_dimension_numbers<[1], [0], [0], [1], [0, 0, 1, 1], [], []>} : vector<8x128xf32>, vector<128x512xf32>, vector<8x512xf32> -> vector<8x512xf32>
    %47 = arith.addf %45, %46 : vector<8x512xf32>
    %48 = vector.extract_strided_slice %47 {offsets = [0, 0], sizes = [8, 128], strides = [1, 1]} : vector<8x512xf32> to vector<8x128xf32>
    %49 = arith.negf %48 : vector<8x128xf32>
    %50 = math.exp %49 : vector<8x128xf32>
    %cst_20 = arith.constant 1.000000e+00 : f32
    %51 = vector.broadcast %cst_20 : f32 to vector<8x128xf32>
    %52 = arith.addf %51, %50 : vector<8x128xf32>
    %53 = arith.divf %51, %52 : vector<8x128xf32>
    %54 = vector.extract_strided_slice %47 {offsets = [0, 128], sizes = [8, 128], strides = [1, 1]} : vector<8x512xf32> to vector<8x128xf32>
    %55 = arith.negf %54 : vector<8x128xf32>
    %56 = math.exp %55 : vector<8x128xf32>
    %cst_21 = arith.constant 1.000000e+00 : f32
    %57 = vector.broadcast %cst_21 : f32 to vector<8x128xf32>
    %58 = arith.addf %57, %56 : vector<8x128xf32>
    %59 = arith.divf %57, %58 : vector<8x128xf32>
    %60 = vector.extract_strided_slice %47 {offsets = [0, 256], sizes = [8, 128], strides = [1, 1]} : vector<8x512xf32> to vector<8x128xf32>
    %61 = math.tanh %60 : vector<8x128xf32>
    %62 = vector.extract_strided_slice %47 {offsets = [0, 384], sizes = [8, 128], strides = [1, 1]} : vector<8x512xf32> to vector<8x128xf32>
    %63 = arith.negf %62 : vector<8x128xf32>
    %64 = math.exp %63 : vector<8x128xf32>
    %cst_22 = arith.constant 1.000000e+00 : f32
    %65 = vector.broadcast %cst_22 : f32 to vector<8x128xf32>
    %66 = arith.addf %65, %64 : vector<8x128xf32>
    %67 = arith.divf %65, %66 : vector<8x128xf32>
    %68 = arith.mulf %59, %39 : vector<8x128xf32>
    %69 = arith.mulf %53, %61 : vector<8x128xf32>
    %70 = arith.addf %68, %69 : vector<8x128xf32>
    %71 = math.tanh %70 : vector<8x128xf32>
    %72 = arith.mulf %67, %71 : vector<8x128xf32>
    %c2_i32 = arith.constant 2 : i32
    %c8_i32_23 = arith.constant 8 : i32
    %73 = arith.muli %c2_i32, %c8_i32_23 : i32
    %74 = tpu.assume_multiple %73, 8 : i32
    %75 = arith.index_cast %74 : i32 to index
    %c0_24 = arith.constant 0 : index
    %76 = vector.load %arg8[%75, %c0_24] : memref<64x512xf32, #tpu.memory_space<vmem>>, vector<8x512xf32>
    %cst_25 = arith.constant dense<0.000000e+00> : vector<8x512xf32>
    %77 = tpu.matmul %72, %8, %cst_25 {dimension_numbers = #tpu.dot_dimension_numbers<[1], [0], [0], [1], [0, 0, 1, 1], [], []>} : vector<8x128xf32>, vector<128x512xf32>, vector<8x512xf32> -> vector<8x512xf32>
    %78 = arith.addf %76, %77 : vector<8x512xf32>
    %79 = vector.extract_strided_slice %78 {offsets = [0, 0], sizes = [8, 128], strides = [1, 1]} : vector<8x512xf32> to vector<8x128xf32>
    %80 = arith.negf %79 : vector<8x128xf32>
    %81 = math.exp %80 : vector<8x128xf32>
    %cst_26 = arith.constant 1.000000e+00 : f32
    %82 = vector.broadcast %cst_26 : f32 to vector<8x128xf32>
    %83 = arith.addf %82, %81 : vector<8x128xf32>
    %84 = arith.divf %82, %83 : vector<8x128xf32>
    %85 = vector.extract_strided_slice %78 {offsets = [0, 128], sizes = [8, 128], strides = [1, 1]} : vector<8x512xf32> to vector<8x128xf32>
    %86 = arith.negf %85 : vector<8x128xf32>
    %87 = math.exp %86 : vector<8x128xf32>
    %cst_27 = arith.constant 1.000000e+00 : f32
    %88 = vector.broadcast %cst_27 : f32 to vector<8x128xf32>
    %89 = arith.addf %88, %87 : vector<8x128xf32>
    %90 = arith.divf %88, %89 : vector<8x128xf32>
    %91 = vector.extract_strided_slice %78 {offsets = [0, 256], sizes = [8, 128], strides = [1, 1]} : vector<8x512xf32> to vector<8x128xf32>
    %92 = math.tanh %91 : vector<8x128xf32>
    %93 = vector.extract_strided_slice %78 {offsets = [0, 384], sizes = [8, 128], strides = [1, 1]} : vector<8x512xf32> to vector<8x128xf32>
    %94 = arith.negf %93 : vector<8x128xf32>
    %95 = math.exp %94 : vector<8x128xf32>
    %cst_28 = arith.constant 1.000000e+00 : f32
    %96 = vector.broadcast %cst_28 : f32 to vector<8x128xf32>
    %97 = arith.addf %96, %95 : vector<8x128xf32>
    %98 = arith.divf %96, %97 : vector<8x128xf32>
    %99 = arith.mulf %90, %70 : vector<8x128xf32>
    %100 = arith.mulf %84, %92 : vector<8x128xf32>
    %101 = arith.addf %99, %100 : vector<8x128xf32>
    %102 = math.tanh %101 : vector<8x128xf32>
    %103 = arith.mulf %98, %102 : vector<8x128xf32>
    %c3_i32 = arith.constant 3 : i32
    %c8_i32_29 = arith.constant 8 : i32
    %104 = arith.muli %c3_i32, %c8_i32_29 : i32
    %105 = tpu.assume_multiple %104, 8 : i32
    %106 = arith.index_cast %105 : i32 to index
    %c0_30 = arith.constant 0 : index
    %107 = vector.load %arg8[%106, %c0_30] : memref<64x512xf32, #tpu.memory_space<vmem>>, vector<8x512xf32>
    %cst_31 = arith.constant dense<0.000000e+00> : vector<8x512xf32>
    %108 = tpu.matmul %103, %8, %cst_31 {dimension_numbers = #tpu.dot_dimension_numbers<[1], [0], [0], [1], [0, 0, 1, 1], [], []>} : vector<8x128xf32>, vector<128x512xf32>, vector<8x512xf32> -> vector<8x512xf32>
    %109 = arith.addf %107, %108 : vector<8x512xf32>
    %110 = vector.extract_strided_slice %109 {offsets = [0, 0], sizes = [8, 128], strides = [1, 1]} : vector<8x512xf32> to vector<8x128xf32>
    %111 = arith.negf %110 : vector<8x128xf32>
    %112 = math.exp %111 : vector<8x128xf32>
    %cst_32 = arith.constant 1.000000e+00 : f32
    %113 = vector.broadcast %cst_32 : f32 to vector<8x128xf32>
    %114 = arith.addf %113, %112 : vector<8x128xf32>
    %115 = arith.divf %113, %114 : vector<8x128xf32>
    %116 = vector.extract_strided_slice %109 {offsets = [0, 128], sizes = [8, 128], strides = [1, 1]} : vector<8x512xf32> to vector<8x128xf32>
    %117 = arith.negf %116 : vector<8x128xf32>
    %118 = math.exp %117 : vector<8x128xf32>
    %cst_33 = arith.constant 1.000000e+00 : f32
    %119 = vector.broadcast %cst_33 : f32 to vector<8x128xf32>
    %120 = arith.addf %119, %118 : vector<8x128xf32>
    %121 = arith.divf %119, %120 : vector<8x128xf32>
    %122 = vector.extract_strided_slice %109 {offsets = [0, 256], sizes = [8, 128], strides = [1, 1]} : vector<8x512xf32> to vector<8x128xf32>
    %123 = math.tanh %122 : vector<8x128xf32>
    %124 = vector.extract_strided_slice %109 {offsets = [0, 384], sizes = [8, 128], strides = [1, 1]} : vector<8x512xf32> to vector<8x128xf32>
    %125 = arith.negf %124 : vector<8x128xf32>
    %126 = math.exp %125 : vector<8x128xf32>
    %cst_34 = arith.constant 1.000000e+00 : f32
    %127 = vector.broadcast %cst_34 : f32 to vector<8x128xf32>
    %128 = arith.addf %127, %126 : vector<8x128xf32>
    %129 = arith.divf %127, %128 : vector<8x128xf32>
    %130 = arith.mulf %121, %101 : vector<8x128xf32>
    %131 = arith.mulf %115, %123 : vector<8x128xf32>
    %132 = arith.addf %130, %131 : vector<8x128xf32>
    %133 = math.tanh %132 : vector<8x128xf32>
    %134 = arith.mulf %129, %133 : vector<8x128xf32>
    %c4_i32 = arith.constant 4 : i32
    %c8_i32_35 = arith.constant 8 : i32
    %135 = arith.muli %c4_i32, %c8_i32_35 : i32
    %136 = tpu.assume_multiple %135, 8 : i32
    %137 = arith.index_cast %136 : i32 to index
    %c0_36 = arith.constant 0 : index
    %138 = vector.load %arg8[%137, %c0_36] : memref<64x512xf32, #tpu.memory_space<vmem>>, vector<8x512xf32>
    %cst_37 = arith.constant dense<0.000000e+00> : vector<8x512xf32>
    %139 = tpu.matmul %134, %8, %cst_37 {dimension_numbers = #tpu.dot_dimension_numbers<[1], [0], [0], [1], [0, 0, 1, 1], [], []>} : vector<8x128xf32>, vector<128x512xf32>, vector<8x512xf32> -> vector<8x512xf32>
    %140 = arith.addf %138, %139 : vector<8x512xf32>
    %141 = vector.extract_strided_slice %140 {offsets = [0, 0], sizes = [8, 128], strides = [1, 1]} : vector<8x512xf32> to vector<8x128xf32>
    %142 = arith.negf %141 : vector<8x128xf32>
    %143 = math.exp %142 : vector<8x128xf32>
    %cst_38 = arith.constant 1.000000e+00 : f32
    %144 = vector.broadcast %cst_38 : f32 to vector<8x128xf32>
    %145 = arith.addf %144, %143 : vector<8x128xf32>
    %146 = arith.divf %144, %145 : vector<8x128xf32>
    %147 = vector.extract_strided_slice %140 {offsets = [0, 128], sizes = [8, 128], strides = [1, 1]} : vector<8x512xf32> to vector<8x128xf32>
    %148 = arith.negf %147 : vector<8x128xf32>
    %149 = math.exp %148 : vector<8x128xf32>
    %cst_39 = arith.constant 1.000000e+00 : f32
    %150 = vector.broadcast %cst_39 : f32 to vector<8x128xf32>
    %151 = arith.addf %150, %149 : vector<8x128xf32>
    %152 = arith.divf %150, %151 : vector<8x128xf32>
    %153 = vector.extract_strided_slice %140 {offsets = [0, 256], sizes = [8, 128], strides = [1, 1]} : vector<8x512xf32> to vector<8x128xf32>
    %154 = math.tanh %153 : vector<8x128xf32>
    %155 = vector.extract_strided_slice %140 {offsets = [0, 384], sizes = [8, 128], strides = [1, 1]} : vector<8x512xf32> to vector<8x128xf32>
    %156 = arith.negf %155 : vector<8x128xf32>
    %157 = math.exp %156 : vector<8x128xf32>
    %cst_40 = arith.constant 1.000000e+00 : f32
    %158 = vector.broadcast %cst_40 : f32 to vector<8x128xf32>
    %159 = arith.addf %158, %157 : vector<8x128xf32>
    %160 = arith.divf %158, %159 : vector<8x128xf32>
    %161 = arith.mulf %152, %132 : vector<8x128xf32>
    %162 = arith.mulf %146, %154 : vector<8x128xf32>
    %163 = arith.addf %161, %162 : vector<8x128xf32>
    %164 = math.tanh %163 : vector<8x128xf32>
    %165 = arith.mulf %160, %164 : vector<8x128xf32>
    %c5_i32 = arith.constant 5 : i32
    %c8_i32_41 = arith.constant 8 : i32
    %166 = arith.muli %c5_i32, %c8_i32_41 : i32
    %167 = tpu.assume_multiple %166, 8 : i32
    %168 = arith.index_cast %167 : i32 to index
    %c0_42 = arith.constant 0 : index
    %169 = vector.load %arg8[%168, %c0_42] : memref<64x512xf32, #tpu.memory_space<vmem>>, vector<8x512xf32>
    %cst_43 = arith.constant dense<0.000000e+00> : vector<8x512xf32>
    %170 = tpu.matmul %165, %8, %cst_43 {dimension_numbers = #tpu.dot_dimension_numbers<[1], [0], [0], [1], [0, 0, 1, 1], [], []>} : vector<8x128xf32>, vector<128x512xf32>, vector<8x512xf32> -> vector<8x512xf32>
    %171 = arith.addf %169, %170 : vector<8x512xf32>
    %172 = vector.extract_strided_slice %171 {offsets = [0, 0], sizes = [8, 128], strides = [1, 1]} : vector<8x512xf32> to vector<8x128xf32>
    %173 = arith.negf %172 : vector<8x128xf32>
    %174 = math.exp %173 : vector<8x128xf32>
    %cst_44 = arith.constant 1.000000e+00 : f32
    %175 = vector.broadcast %cst_44 : f32 to vector<8x128xf32>
    %176 = arith.addf %175, %174 : vector<8x128xf32>
    %177 = arith.divf %175, %176 : vector<8x128xf32>
    %178 = vector.extract_strided_slice %171 {offsets = [0, 128], sizes = [8, 128], strides = [1, 1]} : vector<8x512xf32> to vector<8x128xf32>
    %179 = arith.negf %178 : vector<8x128xf32>
    %180 = math.exp %179 : vector<8x128xf32>
    %cst_45 = arith.constant 1.000000e+00 : f32
    %181 = vector.broadcast %cst_45 : f32 to vector<8x128xf32>
    %182 = arith.addf %181, %180 : vector<8x128xf32>
    %183 = arith.divf %181, %182 : vector<8x128xf32>
    %184 = vector.extract_strided_slice %171 {offsets = [0, 256], sizes = [8, 128], strides = [1, 1]} : vector<8x512xf32> to vector<8x128xf32>
    %185 = math.tanh %184 : vector<8x128xf32>
    %186 = vector.extract_strided_slice %171 {offsets = [0, 384], sizes = [8, 128], strides = [1, 1]} : vector<8x512xf32> to vector<8x128xf32>
    %187 = arith.negf %186 : vector<8x128xf32>
    %188 = math.exp %187 : vector<8x128xf32>
    %cst_46 = arith.constant 1.000000e+00 : f32
    %189 = vector.broadcast %cst_46 : f32 to vector<8x128xf32>
    %190 = arith.addf %189, %188 : vector<8x128xf32>
    %191 = arith.divf %189, %190 : vector<8x128xf32>
    %192 = arith.mulf %183, %163 : vector<8x128xf32>
    %193 = arith.mulf %177, %185 : vector<8x128xf32>
    %194 = arith.addf %192, %193 : vector<8x128xf32>
    %195 = math.tanh %194 : vector<8x128xf32>
    %196 = arith.mulf %191, %195 : vector<8x128xf32>
    %c6_i32 = arith.constant 6 : i32
    %c8_i32_47 = arith.constant 8 : i32
    %197 = arith.muli %c6_i32, %c8_i32_47 : i32
    %198 = tpu.assume_multiple %197, 8 : i32
    %199 = arith.index_cast %198 : i32 to index
    %c0_48 = arith.constant 0 : index
    %200 = vector.load %arg8[%199, %c0_48] : memref<64x512xf32, #tpu.memory_space<vmem>>, vector<8x512xf32>
    %cst_49 = arith.constant dense<0.000000e+00> : vector<8x512xf32>
    %201 = tpu.matmul %196, %8, %cst_49 {dimension_numbers = #tpu.dot_dimension_numbers<[1], [0], [0], [1], [0, 0, 1, 1], [], []>} : vector<8x128xf32>, vector<128x512xf32>, vector<8x512xf32> -> vector<8x512xf32>
    %202 = arith.addf %200, %201 : vector<8x512xf32>
    %203 = vector.extract_strided_slice %202 {offsets = [0, 0], sizes = [8, 128], strides = [1, 1]} : vector<8x512xf32> to vector<8x128xf32>
    %204 = arith.negf %203 : vector<8x128xf32>
    %205 = math.exp %204 : vector<8x128xf32>
    %cst_50 = arith.constant 1.000000e+00 : f32
    %206 = vector.broadcast %cst_50 : f32 to vector<8x128xf32>
    %207 = arith.addf %206, %205 : vector<8x128xf32>
    %208 = arith.divf %206, %207 : vector<8x128xf32>
    %209 = vector.extract_strided_slice %202 {offsets = [0, 128], sizes = [8, 128], strides = [1, 1]} : vector<8x512xf32> to vector<8x128xf32>
    %210 = arith.negf %209 : vector<8x128xf32>
    %211 = math.exp %210 : vector<8x128xf32>
    %cst_51 = arith.constant 1.000000e+00 : f32
    %212 = vector.broadcast %cst_51 : f32 to vector<8x128xf32>
    %213 = arith.addf %212, %211 : vector<8x128xf32>
    %214 = arith.divf %212, %213 : vector<8x128xf32>
    %215 = vector.extract_strided_slice %202 {offsets = [0, 256], sizes = [8, 128], strides = [1, 1]} : vector<8x512xf32> to vector<8x128xf32>
    %216 = math.tanh %215 : vector<8x128xf32>
    %217 = vector.extract_strided_slice %202 {offsets = [0, 384], sizes = [8, 128], strides = [1, 1]} : vector<8x512xf32> to vector<8x128xf32>
    %218 = arith.negf %217 : vector<8x128xf32>
    %219 = math.exp %218 : vector<8x128xf32>
    %cst_52 = arith.constant 1.000000e+00 : f32
    %220 = vector.broadcast %cst_52 : f32 to vector<8x128xf32>
    %221 = arith.addf %220, %219 : vector<8x128xf32>
    %222 = arith.divf %220, %221 : vector<8x128xf32>
    %223 = arith.mulf %214, %194 : vector<8x128xf32>
    %224 = arith.mulf %208, %216 : vector<8x128xf32>
    %225 = arith.addf %223, %224 : vector<8x128xf32>
    %226 = math.tanh %225 : vector<8x128xf32>
    %227 = arith.mulf %222, %226 : vector<8x128xf32>
    %c7_i32 = arith.constant 7 : i32
    %c8_i32_53 = arith.constant 8 : i32
    %228 = arith.muli %c7_i32, %c8_i32_53 : i32
    %229 = tpu.assume_multiple %228, 8 : i32
    %230 = arith.index_cast %229 : i32 to index
    %c0_54 = arith.constant 0 : index
    %231 = vector.load %arg8[%230, %c0_54] : memref<64x512xf32, #tpu.memory_space<vmem>>, vector<8x512xf32>
    %cst_55 = arith.constant dense<0.000000e+00> : vector<8x512xf32>
    %232 = tpu.matmul %227, %8, %cst_55 {dimension_numbers = #tpu.dot_dimension_numbers<[1], [0], [0], [1], [0, 0, 1, 1], [], []>} : vector<8x128xf32>, vector<128x512xf32>, vector<8x512xf32> -> vector<8x512xf32>
    %233 = arith.addf %231, %232 : vector<8x512xf32>
    %234 = vector.extract_strided_slice %233 {offsets = [0, 0], sizes = [8, 128], strides = [1, 1]} : vector<8x512xf32> to vector<8x128xf32>
    %235 = arith.negf %234 : vector<8x128xf32>
    %236 = math.exp %235 : vector<8x128xf32>
    %cst_56 = arith.constant 1.000000e+00 : f32
    %237 = vector.broadcast %cst_56 : f32 to vector<8x128xf32>
    %238 = arith.addf %237, %236 : vector<8x128xf32>
    %239 = arith.divf %237, %238 : vector<8x128xf32>
    %240 = vector.extract_strided_slice %233 {offsets = [0, 128], sizes = [8, 128], strides = [1, 1]} : vector<8x512xf32> to vector<8x128xf32>
    %241 = arith.negf %240 : vector<8x128xf32>
    %242 = math.exp %241 : vector<8x128xf32>
    %cst_57 = arith.constant 1.000000e+00 : f32
    %243 = vector.broadcast %cst_57 : f32 to vector<8x128xf32>
    %244 = arith.addf %243, %242 : vector<8x128xf32>
    %245 = arith.divf %243, %244 : vector<8x128xf32>
    %246 = vector.extract_strided_slice %233 {offsets = [0, 256], sizes = [8, 128], strides = [1, 1]} : vector<8x512xf32> to vector<8x128xf32>
    %247 = math.tanh %246 : vector<8x128xf32>
    %248 = vector.extract_strided_slice %233 {offsets = [0, 384], sizes = [8, 128], strides = [1, 1]} : vector<8x512xf32> to vector<8x128xf32>
    %249 = arith.negf %248 : vector<8x128xf32>
    %250 = math.exp %249 : vector<8x128xf32>
    %cst_58 = arith.constant 1.000000e+00 : f32
    %251 = vector.broadcast %cst_58 : f32 to vector<8x128xf32>
    %252 = arith.addf %251, %250 : vector<8x128xf32>
    %253 = arith.divf %251, %252 : vector<8x128xf32>
    %254 = arith.mulf %245, %225 : vector<8x128xf32>
    %255 = arith.mulf %239, %247 : vector<8x128xf32>
    %256 = arith.addf %254, %255 : vector<8x128xf32>
    %257 = math.tanh %256 : vector<8x128xf32>
    %258 = arith.mulf %253, %257 : vector<8x128xf32>
    %c8_i32_59 = arith.constant 8 : i32
    %c0_60 = arith.constant 0 : index
    %c0_61 = arith.constant 0 : index
    %259 = vector.load %arg5[%c0_60, %c0_61] : memref<128x128xf32, #tpu.memory_space<vmem>>, vector<128x128xf32>
    %cst_62 = arith.constant dense<0.000000e+00> : vector<8x128xf32>
    %260 = tpu.matmul %258, %259, %cst_62 {dimension_numbers = #tpu.dot_dimension_numbers<[1], [0], [0], [1], [0, 0, 1, 1], [], []>} : vector<8x128xf32>, vector<128x128xf32>, vector<8x128xf32> -> vector<8x128xf32>
    %c0_63 = arith.constant 0 : index
    %c0_64 = arith.constant 0 : index
    %261 = vector.load %arg6[%c0_63, %c0_64] : memref<1x128xf32, #tpu.memory_space<vmem>>, vector<1x128xf32>
    %262 = vector.broadcast %261 : vector<1x128xf32> to vector<8x128xf32>
    %263 = arith.addf %260, %262 : vector<8x128xf32>
    %c0_65 = arith.constant 0 : index
    %c0_66 = arith.constant 0 : index
    %264 = vector.load %arg7[%c0_65, %c0_66] : memref<8x128xf32, #tpu.memory_space<vmem>>, vector<8x128xf32>
    tpu.vector_store %arg7[%c0_65, %c0_66], %263 {strides = array<i32>} : memref<8x128xf32, #tpu.memory_space<vmem>>, vector<8x128xf32>,
    return
  }
  func.func @transform_0(%arg0: i32) -> (i32, i32, i32) {
    %c0_i32 = arith.constant 0 : i32
    %c0_i32_0 = arith.constant 0 : i32
    %c0_i32_1 = arith.constant 0 : i32
    return %arg0, %c0_i32, %c0_i32_0 : i32, i32, i32
  }
  func.func @transform_1(%arg0: i32) -> (i32, i32) {
    %c0_i32 = arith.constant 0 : i32
    %c0_i32_0 = arith.constant 0 : i32
    %c0_i32_1 = arith.constant 0 : i32
    return %c0_i32, %c0_i32_0 : i32, i32
  }
  func.func @transform_2(%arg0: i32) -> (i32, i32) {
    %c0_i32 = arith.constant 0 : i32
    %c0_i32_0 = arith.constant 0 : i32
    %c0_i32_1 = arith.constant 0 : i32
    return %c0_i32, %c0_i32_0 : i32, i32
  }
  func.func @transform_3(%arg0: i32) -> (i32, i32) {
    %c0_i32 = arith.constant 0 : i32
    %c0_i32_0 = arith.constant 0 : i32
    %c0_i32_1 = arith.constant 0 : i32
    return %c0_i32, %c0_i32_0 : i32, i32
  }
  func.func @transform_4(%arg0: i32) -> (i32, i32) {
    %c0_i32 = arith.constant 0 : i32
    %c0_i32_0 = arith.constant 0 : i32
    %c0_i32_1 = arith.constant 0 : i32
    return %c0_i32, %c0_i32_0 : i32, i32
  }
  func.func @transform_5(%arg0: i32) -> (i32, i32) {
    %c0_i32 = arith.constant 0 : i32
    %c0_i32_0 = arith.constant 0 : i32
    %c0_i32_1 = arith.constant 0 : i32
    return %c0_i32, %c0_i32_0 : i32, i32
  }
  func.func @transform_6(%arg0: i32) -> (i32, i32) {
    %c0_i32 = arith.constant 0 : i32
    %c0_i32_0 = arith.constant 0 : i32
    return %arg0, %c0_i32 : i32, i32
  }
}

</mosaic_0001>

<llo_original>
// kernel: my_lstm_model_forward.1
$region0: #{my_lstm_model_forward.1}
  #allocation0 [shape = 'u32[]', space=smem, size = 0x4, offset = 0x4, fixed_abs, tag = 'smem constant byte address 0x4 - core index']
  #allocation1 [shape = 'u32[144,128]{1,0:T(1,128)}', space=vmem, size = 0x12000, scoped, tag = 'internal scratch']
  #allocation2 [shape = 'f32[64,512]{1,0:T(8,128)}', space=vmem, size = 0x20000, scoped, tag = 'scratch operand']
  #allocation3 [shape = 'f32[64,128]{1,0:T(8,128)}', space=vmem, size = 0x8000, scoped, tag = 'scratch operand']
  %s0 = inlined_call_operand.vmem [shape: f32[1,64,128], index: 0, kind: input, shape index: {}]
  %s1 = inlined_call_operand.vmem [shape: f32[128,512], index: 1, kind: input, shape index: {}]
  %s2 = inlined_call_operand.vmem [shape: f32[128,512], index: 2, kind: input, shape index: {}]
  %s3 = inlined_call_operand.vmem [shape: f32[1,512], index: 3, kind: input, shape index: {}]
  %s4 = inlined_call_operand.vmem [shape: f32[128,128], index: 4, kind: input, shape index: {}]
  %s5 = inlined_call_operand.vmem [shape: f32[1,128], index: 5, kind: input, shape index: {}]
  %s6 = inlined_call_operand.vmem [shape: f32[8,128], index: 6, kind: output, shape index: {}]
  %s7 = sld [smem:[#allocation0]]
  $region34: #{my_lstm_model_forward.1} parent=0
    _
  %s9 = ssub.s32 1, %s7
  %s10 = scalar_select 0, %s9, %s7
  // Predicated region
  $region2: #{my_lstm_model_forward.1} parent=0 // pred_check
    _
  $region3: #{my_lstm_model_forward.1} parent=0 // pred_check_branch
    %12 = sbr.rel (0) target = $region5
  $region4: #{my_lstm_model_forward.1} parent=0 // pred_region
    _
  $region5: #{my_lstm_model_forward.1} parent=0 // pred_fallthru
    _
  // Predicated region
  $region6: #{my_lstm_model_forward.1} parent=0 // pred_check
    _
  $region7: #{my_lstm_model_forward.1} parent=0 // pred_check_branch
    %14 = sbr.rel (0) target = $region9
  $region8: #{my_lstm_model_forward.1} parent=0 // pred_region
    _
  $region9: #{my_lstm_model_forward.1} parent=0 // pred_fallthru
    _
  // Predicated region
  $region10: #{my_lstm_model_forward.1} parent=0 // pred_check
    _
  $region11: #{my_lstm_model_forward.1} parent=0 // pred_check_branch
    %16 = sbr.rel (0) target = $region13
  $region12: #{my_lstm_model_forward.1} parent=0 // pred_region
    _
  $region13: #{my_lstm_model_forward.1} parent=0 // pred_fallthru
    _
  // Predicated region
  $region14: #{my_lstm_model_forward.1} parent=0 // pred_check
    _
  $region15: #{my_lstm_model_forward.1} parent=0 // pred_check_branch
    %18 = sbr.rel (0) target = $region17
  $region16: #{my_lstm_model_forward.1} parent=0 // pred_region
    _
  $region17: #{my_lstm_model_forward.1} parent=0 // pred_fallthru
    _
  // Predicated region
  $region18: #{my_lstm_model_forward.1} parent=0 // pred_check
    _
  $region19: #{my_lstm_model_forward.1} parent=0 // pred_check_branch
    %20 = sbr.rel (0) target = $region21
  $region20: #{my_lstm_model_forward.1} parent=0 // pred_region
    _
  $region21: #{my_lstm_model_forward.1} parent=0 // pred_fallthru
    _
  // Predicated region
  $region22: #{my_lstm_model_forward.1} parent=0 // pred_check
    _
  $region23: #{my_lstm_model_forward.1} parent=0 // pred_check_branch
    %22 = sbr.rel (0) target = $region25
  $region24: #{my_lstm_model_forward.1} parent=0 // pred_region
    _
  $region25: #{my_lstm_model_forward.1} parent=0 // pred_fallthru
    _
  %v23 = vld [vmem:[%s0] sm:$0xff]
  %v24 = vld [vmem:[%s0 + $0x8] sm:$0xff]
  %v25 = vld [vmem:[%s0 + $0x10] sm:$0xff]
  %v26 = vld [vmem:[%s0 + $0x18] sm:$0xff]
  %v27 = vld [vmem:[%s0 + $0x20] sm:$0xff]
  %v28 = vld [vmem:[%s0 + $0x28] sm:$0xff]
  %v29 = vld [vmem:[%s0 + $0x30] sm:$0xff]
  %v30 = vld [vmem:[%s0 + $0x38] sm:$0xff]
  %v31 = vld [vmem:[%s1] sm:$0xff]
  %v32 = vld [vmem:[%s1 + $0x8] sm:$0xff]
  %v33 = vld [vmem:[%s1 + $0x10] sm:$0xff]
  %v34 = vld [vmem:[%s1 + $0x18] sm:$0xff]
  %v35 = vld [vmem:[%s1 + $0x20] sm:$0xff]
  %v36 = vld [vmem:[%s1 + $0x28] sm:$0xff]
  %v37 = vld [vmem:[%s1 + $0x30] sm:$0xff]
  %v38 = vld [vmem:[%s1 + $0x38] sm:$0xff]
  %v39 = vld [vmem:[%s1 + $0x40] sm:$0xff]
  %v40 = vld [vmem:[%s1 + $0x48] sm:$0xff]
  %v41 = vld [vmem:[%s1 + $0x50] sm:$0xff]
  %v42 = vld [vmem:[%s1 + $0x58] sm:$0xff]
  %v43 = vld [vmem:[%s1 + $0x60] sm:$0xff]
  %v44 = vld [vmem:[%s1 + $0x68] sm:$0xff]
  %v45 = vld [vmem:[%s1 + $0x70] sm:$0xff]
  %v46 = vld [vmem:[%s1 + $0x78] sm:$0xff]
  %v47 = vld [vmem:[%s1 + $0x80] sm:$0xff]
  %v48 = vld [vmem:[%s1 + $0x88] sm:$0xff]
  %v49 = vld [vmem:[%s1 + $0x90] sm:$0xff]
  %v50 = vld [vmem:[%s1 + $0x98] sm:$0xff]
  %v51 = vld [vmem:[%s1 + $0xa0] sm:$0xff]
  %v52 = vld [vmem:[%s1 + $0xa8] sm:$0xff]
  %v53 = vld [vmem:[%s1 + $0xb0] sm:$0xff]
  %v54 = vld [vmem:[%s1 + $0xb8] sm:$0xff]
  %v55 = vld [vmem:[%s1 + $0xc0] sm:$0xff]
  %v56 = vld [vmem:[%s1 + $0xc8] sm:$0xff]
  %v57 = vld [vmem:[%s1 + $0xd0] sm:$0xff]
  %v58 = vld [vmem:[%s1 + $0xd8] sm:$0xff]
  %v59 = vld [vmem:[%s1 + $0xe0] sm:$0xff]
  %v60 = vld [vmem:[%s1 + $0xe8] sm:$0xff]
  %v61 = vld [vmem:[%s1 + $0xf0] sm:$0xff]
  %v62 = vld [vmem:[%s1 + $0xf8] sm:$0xff]
  %v63 = vld [vmem:[%s1 + $0x100] sm:$0xff]
  %v64 = vld [vmem:[%s1 + $0x108] sm:$0xff]
  %v65 = vld [vmem:[%s1 + $0x110] sm:$0xff]
  %v66 = vld [vmem:[%s1 + $0x118] sm:$0xff]
  %v67 = vld [vmem:[%s1 + $0x120] sm:$0xff]
  %v68 = vld [vmem:[%s1 + $0x128] sm:$0xff]
  %v69 = vld [vmem:[%s1 + $0x130] sm:$0xff]
  %v70 = vld [vmem:[%s1 + $0x138] sm:$0xff]
  %v71 = vld [vmem:[%s1 + $0x140] sm:$0xff]
  %v72 = vld [vmem:[%s1 + $0x148] sm:$0xff]
  %v73 = vld [vmem:[%s1 + $0x150] sm:$0xff]
  %v74 = vld [vmem:[%s1 + $0x158] sm:$0xff]
  %v75 = vld [vmem:[%s1 + $0x160] sm:$0xff]
  %v76 = vld [vmem:[%s1 + $0x168] sm:$0xff]
  %v77 = vld [vmem:[%s1 + $0x170] sm:$0xff]
  %v78 = vld [vmem:[%s1 + $0x178] sm:$0xff]
  %v79 = vld [vmem:[%s1 + $0x180] sm:$0xff]
  %v80 = vld [vmem:[%s1 + $0x188] sm:$0xff]
  %v81 = vld [vmem:[%s1 + $0x190] sm:$0xff]
  %v82 = vld [vmem:[%s1 + $0x198] sm:$0xff]
  %v83 = vld [vmem:[%s1 + $0x1a0] sm:$0xff]
  %v84 = vld [vmem:[%s1 + $0x1a8] sm:$0xff]
  %v85 = vld [vmem:[%s1 + $0x1b0] sm:$0xff]
  %v86 = vld [vmem:[%s1 + $0x1b8] sm:$0xff]
  %v87 = vld [vmem:[%s1 + $0x1c0] sm:$0xff]
  %v88 = vld [vmem:[%s1 + $0x1c8] sm:$0xff]
  %v89 = vld [vmem:[%s1 + $0x1d0] sm:$0xff]
  %v90 = vld [vmem:[%s1 + $0x1d8] sm:$0xff]
  %v91 = vld [vmem:[%s1 + $0x1e0] sm:$0xff]
  %v92 = vld [vmem:[%s1 + $0x1e8] sm:$0xff]
  %v93 = vld [vmem:[%s1 + $0x1f0] sm:$0xff]
  %v94 = vld [vmem:[%s1 + $0x1f8] sm:$0xff]
  %v95 = vld [vmem:[%s3] sm:$0xf]
  %v97 = vlaneseq
  %v98 = vshrl.u32 %v97, 7
  %v99 = vsub.s32 0, %v98
  %v100 = vrot.slane %v95, %v99
  %v101 = vlaneseq
  %v102 = vshrl.u32 %v101, 7
  %v103 = vsub.s32 1, %v102
  %v104 = vrot.slane %v95, %v103
  %v105 = vlaneseq
  %v106 = vshrl.u32 %v105, 7
  %v107 = vsub.s32 2, %v106
  %v108 = vrot.slane %v95, %v107
  %v109 = vlaneseq
  %v110 = vshrl.u32 %v109, 7
  %v111 = vsub.s32 3, %v110
  %v112 = vrot.slane %v95, %v111
  %117 = vmatprep.subr.mxu0 %v32
  %118 = vmatpush1.msra.mxu0 %v31
  %119 = vmatprep.subr.mxu0 %v36
  %120 = vmatpush1.msra.mxu0 %v35
  %121 = vmatprep.subr.mxu0 %v40
  %122 = vmatpush1.msra.mxu0 %v39
  %123 = vmatprep.subr.mxu0 %v44
  %124 = vmatpush1.msra.mxu0 %v43
  %125 = vmatprep.subr.mxu0 %v48
  %126 = vmatpush1.msra.mxu0 %v47
  %127 = vmatprep.subr.mxu0 %v52
  %128 = vmatpush1.msra.mxu0 %v51
  %129 = vmatprep.subr.mxu0 %v56
  %130 = vmatpush1.msra.mxu0 %v55
  %131 = vmatprep.subr.mxu0 %v60
  %132 = vmatpush1.msra.mxu0 %v59
  %133 = vmatprep.subr.mxu0 %v64
  %134 = vmatpush1.msra.mxu0 %v63
  %135 = vmatprep.subr.mxu0 %v68
  %136 = vmatpush1.msra.mxu0 %v67
  %137 = vmatprep.subr.mxu0 %v72
  %138 = vmatpush1.msra.mxu0 %v71
  %139 = vmatprep.subr.mxu0 %v76
  %140 = vmatpush1.msra.mxu0 %v75
  %141 = vmatprep.subr.mxu0 %v80
  %142 = vmatpush1.msra.mxu0 %v79
  %143 = vmatprep.subr.mxu0 %v84
  %144 = vmatpush1.msra.mxu0 %v83
  %145 = vmatprep.subr.mxu0 %v88
  %146 = vmatpush1.msra.mxu0 %v87
  %147 = vmatprep.subr.mxu0 %v92
  %148 = vmatpush1.msra.mxu0 %v91
  %149 = vmatprep.subr.mxu0 0.0
  %150 = vmatpush1.msra.mxu0 0.0
  %151 = vmatprep.subr.mxu0 0.0
  %152 = vmatpush1.msra.mxu0 0.0
  %153 = vmatprep.subr.mxu0 0.0
  %154 = vmatpush1.msra.mxu0 0.0
  %155 = vmatprep.subr.mxu0 0.0
  %156 = vmatpush1.msra.mxu0 0.0
  %157 = vmatprep.subr.mxu0 0.0
  %158 = vmatpush1.msra.mxu0 0.0
  %159 = vmatprep.subr.mxu0 0.0
  %160 = vmatpush1.msra.mxu0 0.0
  %161 = vmatprep.subr.mxu0 0.0
  %162 = vmatpush1.msra.mxu0 0.0
  %163 = vmatprep.subr.mxu0 0.0
  %164 = vmatpush1.msra.mxu0 0.0
  %165 = vmatprep.subr.mxu0 0.0
  %166 = vmatpush1.msra.mxu0 0.0
  %167 = vmatprep.subr.mxu0 0.0
  %168 = vmatpush1.msra.mxu0 0.0
  %169 = vmatprep.subr.mxu0 0.0
  %170 = vmatpush1.msra.mxu0 0.0
  %171 = vmatprep.subr.mxu0 0.0
  %172 = vmatpush1.msra.mxu0 0.0
  %173 = vmatprep.subr.mxu0 0.0
  %174 = vmatpush1.msra.mxu0 0.0
  %175 = vmatprep.subr.mxu0 0.0
  %176 = vmatpush1.msra.mxu0 0.0
  %177 = vmatprep.subr.mxu0 0.0
  %178 = vmatpush1.msra.mxu0 0.0
  %179 = vmatprep.subr.mxu0 0.0
  %180 = vmatpush1.msra.mxu0 0.0
  %181 = vmatprep.mubr.f32.mxu0 0.0
  %182 = vmatmul.mubr.f32.gmra.mrb[0].mxu0 %v23
  %v183 = vpop.f32.mrb[0].mxu0
  %v184 = vadd.f32 %v100, %v183
  %v185 = vpop.f32.mrb[0].mxu0
  %v186 = vadd.f32 %v104, %v185
  %187 = vmatprep.mubr.f32.mxu0 0.0
  %188 = vmatmul.mubr.f32.gmra.mrb[0].mxu0 %v24
  %v189 = vpop.f32.mrb[0].mxu0
  %v190 = vadd.f32 %v100, %v189
  %v191 = vpop.f32.mrb[0].mxu0
  %v192 = vadd.f32 %v104, %v191
  %193 = vmatprep.mubr.f32.mxu0 0.0
  %194 = vmatmul.mubr.f32.gmra.mrb[0].mxu0 %v25
  %v195 = vpop.f32.mrb[0].mxu0
  %v196 = vadd.f32 %v100, %v195
  %v197 = vpop.f32.mrb[0].mxu0
  %v198 = vadd.f32 %v104, %v197
  %199 = vmatprep.mubr.f32.mxu0 0.0
  %200 = vmatmul.mubr.f32.gmra.mrb[0].mxu0 %v26
  %v201 = vpop.f32.mrb[0].mxu0
  %v202 = vadd.f32 %v100, %v201
  %v203 = vpop.f32.mrb[0].mxu0
  %v204 = vadd.f32 %v104, %v203
  %205 = vmatprep.mubr.f32.mxu0 0.0
  %206 = vmatmul.mubr.f32.gmra.mrb[0].mxu0 %v27
  %v207 = vpop.f32.mrb[0].mxu0
  %v208 = vadd.f32 %v100, %v207
  %v209 = vpop.f32.mrb[0].mxu0
  %v210 = vadd.f32 %v104, %v209
  %211 = vmatprep.mubr.f32.mxu0 0.0
  %212 = vmatmul.mubr.f32.gmra.mrb[0].mxu0 %v28
  %v213 = vpop.f32.mrb[0].mxu0
  %v214 = vadd.f32 %v100, %v213
  %v215 = vpop.f32.mrb[0].mxu0
  %v216 = vadd.f32 %v104, %v215
  %217 = vmatprep.mubr.f32.mxu0 0.0
  %218 = vmatmul.mubr.f32.gmra.mrb[0].mxu0 %v29
  %v219 = vpop.f32.mrb[0].mxu0
  %v220 = vadd.f32 %v100, %v219
  %v221 = vpop.f32.mrb[0].mxu0
  %v222 = vadd.f32 %v104, %v221
  %223 = vmatprep.mubr.f32.mxu0 0.0
  %224 = vmatmul.mubr.f32.gmra.mrb[0].mxu0 %v30
  %v225 = vpop.f32.mrb[0].mxu0
  %v226 = vadd.f32 %v100, %v225
  %v227 = vpop.f32.mrb[0].mxu0
  %v228 = vadd.f32 %v104, %v227
  %229 = vdwg.mxu0
  %230 = vmatprep.subr.mxu0 %v34
  %231 = vmatpush1.msra.mxu0 %v33
  %232 = vmatprep.subr.mxu0 %v38
  %233 = vmatpush1.msra.mxu0 %v37
  %234 = vmatprep.subr.mxu0 %v42
  %235 = vmatpush1.msra.mxu0 %v41
  %236 = vmatprep.subr.mxu0 %v46
  %237 = vmatpush1.msra.mxu0 %v45
  %238 = vmatprep.subr.mxu0 %v50
  %239 = vmatpush1.msra.mxu0 %v49
  %240 = vmatprep.subr.mxu0 %v54
  %241 = vmatpush1.msra.mxu0 %v53
  %242 = vmatprep.subr.mxu0 %v58
  %243 = vmatpush1.msra.mxu0 %v57
  %244 = vmatprep.subr.mxu0 %v62
  %245 = vmatpush1.msra.mxu0 %v61
  %246 = vmatprep.subr.mxu0 %v66
  %247 = vmatpush1.msra.mxu0 %v65
  %248 = vmatprep.subr.mxu0 %v70
  %249 = vmatpush1.msra.mxu0 %v69
  %250 = vmatprep.subr.mxu0 %v74
  %251 = vmatpush1.msra.mxu0 %v73
  %252 = vmatprep.subr.mxu0 %v78
  %253 = vmatpush1.msra.mxu0 %v77
  %254 = vmatprep.subr.mxu0 %v82
  %255 = vmatpush1.msra.mxu0 %v81
  %256 = vmatprep.subr.mxu0 %v86
  %257 = vmatpush1.msra.mxu0 %v85
  %258 = vmatprep.subr.mxu0 %v90
  %259 = vmatpush1.msra.mxu0 %v89
  %260 = vmatprep.subr.mxu0 %v94
  %261 = vmatpush1.msra.mxu0 %v93
  %262 = vmatprep.subr.mxu0 0.0
  %263 = vmatpush1.msra.mxu0 0.0
  %264 = vmatprep.subr.mxu0 0.0
  %265 = vmatpush1.msra.mxu0 0.0
  %266 = vmatprep.subr.mxu0 0.0
  %267 = vmatpush1.msra.mxu0 0.0
  %268 = vmatprep.subr.mxu0 0.0
  %269 = vmatpush1.msra.mxu0 0.0
  %270 = vmatprep.subr.mxu0 0.0
  %271 = vmatpush1.msra.mxu0 0.0
  %272 = vmatprep.subr.mxu0 0.0
  %273 = vmatpush1.msra.mxu0 0.0
  %274 = vmatprep.subr.mxu0 0.0
  %275 = vmatpush1.msra.mxu0 0.0
  %276 = vmatprep.subr.mxu0 0.0
  %277 = vmatpush1.msra.mxu0 0.0
  %278 = vmatprep.subr.mxu0 0.0
  %279 = vmatpush1.msra.mxu0 0.0
  %280 = vmatprep.subr.mxu0 0.0
  %281 = vmatpush1.msra.mxu0 0.0
  %282 = vmatprep.subr.mxu0 0.0
  %283 = vmatpush1.msra.mxu0 0.0
  %284 = vmatprep.subr.mxu0 0.0
  %285 = vmatpush1.msra.mxu0 0.0
  %286 = vmatprep.subr.mxu0 0.0
  %287 = vmatpush1.msra.mxu0 0.0
  %288 = vmatprep.subr.mxu0 0.0
  %289 = vmatpush1.msra.mxu0 0.0
  %290 = vmatprep.subr.mxu0 0.0
  %291 = vmatpush1.msra.mxu0 0.0
  %292 = vmatprep.subr.mxu0 0.0
  %293 = vmatpush1.msra.mxu0 0.0
  %294 = vmatprep.mubr.f32.mxu0 0.0
  %295 = vmatmul.mubr.f32.gmra.mrb[0].mxu0 %v23
  %v296 = vpop.f32.mrb[0].mxu0
  %v297 = vadd.f32 %v108, %v296
  %v298 = vpop.f32.mrb[0].mxu0
  %v299 = vadd.f32 %v112, %v298
  %300 = vmatprep.mubr.f32.mxu0 0.0
  %301 = vmatmul.mubr.f32.gmra.mrb[0].mxu0 %v24
  %v302 = vpop.f32.mrb[0].mxu0
  %v303 = vadd.f32 %v108, %v302
  %v304 = vpop.f32.mrb[0].mxu0
  %v305 = vadd.f32 %v112, %v304
  %306 = vmatprep.mubr.f32.mxu0 0.0
  %307 = vmatmul.mubr.f32.gmra.mrb[0].mxu0 %v25
  %v308 = vpop.f32.mrb[0].mxu0
  %v309 = vadd.f32 %v108, %v308
  %v310 = vpop.f32.mrb[0].mxu0
  %v311 = vadd.f32 %v112, %v310
  %312 = vmatprep.mubr.f32.mxu0 0.0
  %313 = vmatmul.mubr.f32.gmra.mrb[0].mxu0 %v26
  %v314 = vpop.f32.mrb[0].mxu0
  %v315 = vadd.f32 %v108, %v314
  %v316 = vpop.f32.mrb[0].mxu0
  %v317 = vadd.f32 %v112, %v316
  %318 = vmatprep.mubr.f32.mxu0 0.0
  %319 = vmatmul.mubr.f32.gmra.mrb[0].mxu0 %v27
  %v320 = vpop.f32.mrb[0].mxu0
  %v321 = vadd.f32 %v108, %v320
  %v322 = vpop.f32.mrb[0].mxu0
  %v323 = vadd.f32 %v112, %v322
  %324 = vmatprep.mubr.f32.mxu0 0.0
  %325 = vmatmul.mubr.f32.gmra.mrb[0].mxu0 %v28
  %v326 = vpop.f32.mrb[0].mxu0
  %v327 = vadd.f32 %v108, %v326
  %v328 = vpop.f32.mrb[0].mxu0
  %v329 = vadd.f32 %v112, %v328
  %330 = vmatprep.mubr.f32.mxu0 0.0
  %331 = vmatmul.mubr.f32.gmra.mrb[0].mxu0 %v29
  %v332 = vpop.f32.mrb[0].mxu0
  %v333 = vadd.f32 %v108, %v332
  %v334 = vpop.f32.mrb[0].mxu0
  %v335 = vadd.f32 %v112, %v334
  %336 = vmatprep.mubr.f32.mxu0 0.0
  %337 = vmatmul.mubr.f32.gmra.mrb[0].mxu0 %v30
  %v338 = vpop.f32.mrb[0].mxu0
  %v339 = vadd.f32 %v108, %v338
  %v340 = vpop.f32.mrb[0].mxu0
  %v341 = vadd.f32 %v112, %v340
  %342 = vdwg.mxu0
  %343 = vst [vmem:[#allocation2] sm:$0xff] %v184
  %344 = vst [vmem:[#allocation2 + $0x8] sm:$0xff] %v186
  %345 = vst [vmem:[#allocation2 + $0x10] sm:$0xff] %v297
  %346 = vst [vmem:[#allocation2 + $0x18] sm:$0xff] %v299
  %347 = vst [vmem:[#allocation2 + $0x20] sm:$0xff] %v190
  %348 = vst [vmem:[#allocation2 + $0x28] sm:$0xff] %v192
  %349 = vst [vmem:[#allocation2 + $0x30] sm:$0xff] %v303
  %350 = vst [vmem:[#allocation2 + $0x38] sm:$0xff] %v305
  %351 = vst [vmem:[#allocation2 + $0x40] sm:$0xff] %v196
  %352 = vst [vmem:[#allocation2 + $0x48] sm:$0xff] %v198
  %353 = vst [vmem:[#allocation2 + $0x50] sm:$0xff] %v309
  %354 = vst [vmem:[#allocation2 + $0x58] sm:$0xff] %v311
  %355 = vst [vmem:[#allocation2 + $0x60] sm:$0xff] %v202
  %356 = vst [vmem:[#allocation2 + $0x68] sm:$0xff] %v204
  %357 = vst [vmem:[#allocation2 + $0x70] sm:$0xff] %v315
  %358 = vst [vmem:[#allocation2 + $0x78] sm:$0xff] %v317
  %359 = vst [vmem:[#allocation2 + $0x80] sm:$0xff] %v208
  %360 = vst [vmem:[#allocation2 + $0x88] sm:$0xff] %v210
  %361 = vst [vmem:[#allocation2 + $0x90] sm:$0xff] %v321
  %362 = vst [vmem:[#allocation2 + $0x98] sm:$0xff] %v323
  %363 = vst [vmem:[#allocation2 + $0xa0] sm:$0xff] %v214
  %364 = vst [vmem:[#allocation2 + $0xa8] sm:$0xff] %v216
  %365 = vst [vmem:[#allocation2 + $0xb0] sm:$0xff] %v327
  %366 = vst [vmem:[#allocation2 + $0xb8] sm:$0xff] %v329
  %367 = vst [vmem:[#allocation2 + $0xc0] sm:$0xff] %v220
  %368 = vst [vmem:[#allocation2 + $0xc8] sm:$0xff] %v222
  %369 = vst [vmem:[#allocation2 + $0xd0] sm:$0xff] %v333
  %370 = vst [vmem:[#allocation2 + $0xd8] sm:$0xff] %v335
  %371 = vst [vmem:[#allocation2 + $0xe0] sm:$0xff] %v226
  %372 = vst [vmem:[#allocation2 + $0xe8] sm:$0xff] %v228
  %373 = vst [vmem:[#allocation2 + $0xf0] sm:$0xff] %v339
  %374 = vst [vmem:[#allocation2 + $0xf8] sm:$0xff] %v341
  %v375 = vld [vmem:[%s2] sm:$0xff]
  %v376 = vld [vmem:[%s2 + $0x8] sm:$0xff]
  %v377 = vld [vmem:[%s2 + $0x10] sm:$0xff]
  %v378 = vld [vmem:[%s2 + $0x18] sm:$0xff]
  %v379 = vld [vmem:[%s2 + $0x20] sm:$0xff]
  %v380 = vld [vmem:[%s2 + $0x28] sm:$0xff]
  %v381 = vld [vmem:[%s2 + $0x30] sm:$0xff]
  %v382 = vld [vmem:[%s2 + $0x38] sm:$0xff]
  %v383 = vld [vmem:[%s2 + $0x40] sm:$0xff]
  %v384 = vld [vmem:[%s2 + $0x48] sm:$0xff]
  %v385 = vld [vmem:[%s2 + $0x50] sm:$0xff]
  %v386 = vld [vmem:[%s2 + $0x58] sm:$0xff]
  %v387 = vld [vmem:[%s2 + $0x60] sm:$0xff]
  %v388 = vld [vmem:[%s2 + $0x68] sm:$0xff]
  %v389 = vld [vmem:[%s2 + $0x70] sm:$0xff]
  %v390 = vld [vmem:[%s2 + $0x78] sm:$0xff]
  %v391 = vld [vmem:[%s2 + $0x80] sm:$0xff]
  %v392 = vld [vmem:[%s2 + $0x88] sm:$0xff]
  %v393 = vld [vmem:[%s2 + $0x90] sm:$0xff]
  %v394 = vld [vmem:[%s2 + $0x98] sm:$0xff]
  %v395 = vld [vmem:[%s2 + $0xa0] sm:$0xff]
  %v396 = vld [vmem:[%s2 + $0xa8] sm:$0xff]
  %v397 = vld [vmem:[%s2 + $0xb0] sm:$0xff]
  %v398 = vld [vmem:[%s2 + $0xb8] sm:$0xff]
  %v399 = vld [vmem:[%s2 + $0xc0] sm:$0xff]
  %v400 = vld [vmem:[%s2 + $0xc8] sm:$0xff]
  %v401 = vld [vmem:[%s2 + $0xd0] sm:$0xff]
  %v402 = vld [vmem:[%s2 + $0xd8] sm:$0xff]
  %v403 = vld [vmem:[%s2 + $0xe0] sm:$0xff]
  %v404 = vld [vmem:[%s2 + $0xe8] sm:$0xff]
  %v405 = vld [vmem:[%s2 + $0xf0] sm:$0xff]
  %v406 = vld [vmem:[%s2 + $0xf8] sm:$0xff]
  %v407 = vld [vmem:[%s2 + $0x100] sm:$0xff]
  %v408 = vld [vmem:[%s2 + $0x108] sm:$0xff]
  %v409 = vld [vmem:[%s2 + $0x110] sm:$0xff]
  %v410 = vld [vmem:[%s2 + $0x118] sm:$0xff]
  %v411 = vld [vmem:[%s2 + $0x120] sm:$0xff]
  %v412 = vld [vmem:[%s2 + $0x128] sm:$0xff]
  %v413 = vld [vmem:[%s2 + $0x130] sm:$0xff]
  %v414 = vld [vmem:[%s2 + $0x138] sm:$0xff]
  %v415 = vld [vmem:[%s2 + $0x140] sm:$0xff]
  %v416 = vld [vmem:[%s2 + $0x148] sm:$0xff]
  %v417 = vld [vmem:[%s2 + $0x150] sm:$0xff]
  %v418 = vld [vmem:[%s2 + $0x158] sm:$0xff]
  %v419 = vld [vmem:[%s2 + $0x160] sm:$0xff]
  %v420 = vld [vmem:[%s2 + $0x168] sm:$0xff]
  %v421 = vld [vmem:[%s2 + $0x170] sm:$0xff]
  %v422 = vld [vmem:[%s2 + $0x178] sm:$0xff]
  %v423 = vld [vmem:[%s2 + $0x180] sm:$0xff]
  %v424 = vld [vmem:[%s2 + $0x188] sm:$0xff]
  %v425 = vld [vmem:[%s2 + $0x190] sm:$0xff]
  %v426 = vld [vmem:[%s2 + $0x198] sm:$0xff]
  %v427 = vld [vmem:[%s2 + $0x1a0] sm:$0xff]
  %v428 = vld [vmem:[%s2 + $0x1a8] sm:$0xff]
  %v429 = vld [vmem:[%s2 + $0x1b0] sm:$0xff]
  %v430 = vld [vmem:[%s2 + $0x1b8] sm:$0xff]
  %v431 = vld [vmem:[%s2 + $0x1c0] sm:$0xff]
  %v432 = vld [vmem:[%s2 + $0x1c8] sm:$0xff]
  %v433 = vld [vmem:[%s2 + $0x1d0] sm:$0xff]
  %v434 = vld [vmem:[%s2 + $0x1d8] sm:$0xff]
  %v435 = vld [vmem:[%s2 + $0x1e0] sm:$0xff]
  %v436 = vld [vmem:[%s2 + $0x1e8] sm:$0xff]
  %v437 = vld [vmem:[%s2 + $0x1f0] sm:$0xff]
  %v438 = vld [vmem:[%s2 + $0x1f8] sm:$0xff]
  %s439 = smul.u32 0, 4
  %s440 = smul.addr %s439, 8
  %s441 = scalar_lea.vmem [#allocation2], %s440
  %v442 = vld [vmem:[%s441] sm:$0xff]
  %v443 = vld [vmem:[%s441 + $0x8] sm:$0xff]
  %v444 = vld [vmem:[%s441 + $0x10] sm:$0xff]
  %v445 = vld [vmem:[%s441 + $0x18] sm:$0xff]
  %446 = vmatprep.subr.mxu0 %v376
  %447 = vmatpush1.msra.mxu0 %v375
  %448 = vmatprep.subr.mxu0 %v380
  %449 = vmatpush1.msra.mxu0 %v379
  %450 = vmatprep.subr.mxu0 %v384
  %451 = vmatpush1.msra.mxu0 %v383
  %452 = vmatprep.subr.mxu0 %v388
  %453 = vmatpush1.msra.mxu0 %v387
  %454 = vmatprep.subr.mxu0 %v392
  %455 = vmatpush1.msra.mxu0 %v391
  %456 = vmatprep.subr.mxu0 %v396
  %457 = vmatpush1.msra.mxu0 %v395
  %458 = vmatprep.subr.mxu0 %v400
  %459 = vmatpush1.msra.mxu0 %v399
  %460 = vmatprep.subr.mxu0 %v404
  %461 = vmatpush1.msra.mxu0 %v403
  %462 = vmatprep.subr.mxu0 %v408
  %463 = vmatpush1.msra.mxu0 %v407
  %464 = vmatprep.subr.mxu0 %v412
  %465 = vmatpush1.msra.mxu0 %v411
  %466 = vmatprep.subr.mxu0 %v416
  %467 = vmatpush1.msra.mxu0 %v415
  %468 = vmatprep.subr.mxu0 %v420
  %469 = vmatpush1.msra.mxu0 %v419
  %470 = vmatprep.subr.mxu0 %v424
  %471 = vmatpush1.msra.mxu0 %v423
  %472 = vmatprep.subr.mxu0 %v428
  %473 = vmatpush1.msra.mxu0 %v427
  %474 = vmatprep.subr.mxu0 %v432
  %475 = vmatpush1.msra.mxu0 %v431
  %476 = vmatprep.subr.mxu0 %v436
  %477 = vmatpush1.msra.mxu0 %v435
  %478 = vmatprep.subr.mxu0 0.0
  %479 = vmatpush1.msra.mxu0 0.0
  %480 = vmatprep.subr.mxu0 0.0
  %481 = vmatpush1.msra.mxu0 0.0
  %482 = vmatprep.subr.mxu0 0.0
  %483 = vmatpush1.msra.mxu0 0.0
  %484 = vmatprep.subr.mxu0 0.0
  %485 = vmatpush1.msra.mxu0 0.0
  %486 = vmatprep.subr.mxu0 0.0
  %487 = vmatpush1.msra.mxu0 0.0
  %488 = vmatprep.subr.mxu0 0.0
  %489 = vmatpush1.msra.mxu0 0.0
  %490 = vmatprep.subr.mxu0 0.0
  %491 = vmatpush1.msra.mxu0 0.0
  %492 = vmatprep.subr.mxu0 0.0
  %493 = vmatpush1.msra.mxu0 0.0
  %494 = vmatprep.subr.mxu0 0.0
  %495 = vmatpush1.msra.mxu0 0.0
  %496 = vmatprep.subr.mxu0 0.0
  %497 = vmatpush1.msra.mxu0 0.0
  %498 = vmatprep.subr.mxu0 0.0
  %499 = vmatpush1.msra.mxu0 0.0
  %500 = vmatprep.subr.mxu0 0.0
  %501 = vmatpush1.msra.mxu0 0.0
  %502 = vmatprep.subr.mxu0 0.0
  %503 = vmatpush1.msra.mxu0 0.0
  %504 = vmatprep.subr.mxu0 0.0
  %505 = vmatpush1.msra.mxu0 0.0
  %506 = vmatprep.subr.mxu0 0.0
  %507 = vmatpush1.msra.mxu0 0.0
  %508 = vmatprep.subr.mxu0 0.0
  %509 = vmatpush1.msra.mxu0 0.0
  %510 = vmatprep.mubr.f32.mxu0 0.0
  %511 = vmatmul.mubr.f32.gmra.mrb[0].mxu0 0.0
  %v512 = vpop.f32.mrb[0].mxu0
  %v513 = vadd.f32 0.0, %v512
  %v514 = vpop.f32.mrb[0].mxu0
  %v515 = vadd.f32 0.0, %v514
  %516 = vdwg.mxu0
  %517 = vmatprep.subr.mxu0 %v378
  %518 = vmatpush1.msra.mxu0 %v377
  %519 = vmatprep.subr.mxu0 %v382
  %520 = vmatpush1.msra.mxu0 %v381
  %521 = vmatprep.subr.mxu0 %v386
  %522 = vmatpush1.msra.mxu0 %v385
  %523 = vmatprep.subr.mxu0 %v390
  %524 = vmatpush1.msra.mxu0 %v389
  %525 = vmatprep.subr.mxu0 %v394
  %526 = vmatpush1.msra.mxu0 %v393
  %527 = vmatprep.subr.mxu0 %v398
  %528 = vmatpush1.msra.mxu0 %v397
  %529 = vmatprep.subr.mxu0 %v402
  %530 = vmatpush1.msra.mxu0 %v401
  %531 = vmatprep.subr.mxu0 %v406
  %532 = vmatpush1.msra.mxu0 %v405
  %533 = vmatprep.subr.mxu0 %v410
  %534 = vmatpush1.msra.mxu0 %v409
  %535 = vmatprep.subr.mxu0 %v414
  %536 = vmatpush1.msra.mxu0 %v413
  %537 = vmatprep.subr.mxu0 %v418
  %538 = vmatpush1.msra.mxu0 %v417
  %539 = vmatprep.subr.mxu0 %v422
  %540 = vmatpush1.msra.mxu0 %v421
  %541 = vmatprep.subr.mxu0 %v426
  %542 = vmatpush1.msra.mxu0 %v425
  %543 = vmatprep.subr.mxu0 %v430
  %544 = vmatpush1.msra.mxu0 %v429
  %545 = vmatprep.subr.mxu0 %v434
  %546 = vmatpush1.msra.mxu0 %v433
  %547 = vmatprep.subr.mxu0 %v438
  %548 = vmatpush1.msra.mxu0 %v437
  %549 = vmatprep.subr.mxu0 0.0
  %550 = vmatpush1.msra.mxu0 0.0
  %551 = vmatprep.subr.mxu0 0.0
  %552 = vmatpush1.msra.mxu0 0.0
  %553 = vmatprep.subr.mxu0 0.0
  %554 = vmatpush1.msra.mxu0 0.0
  %555 = vmatprep.subr.mxu0 0.0
  %556 = vmatpush1.msra.mxu0 0.0
  %557 = vmatprep.subr.mxu0 0.0
  %558 = vmatpush1.msra.mxu0 0.0
  %559 = vmatprep.subr.mxu0 0.0
  %560 = vmatpush1.msra.mxu0 0.0
  %561 = vmatprep.subr.mxu0 0.0
  %562 = vmatpush1.msra.mxu0 0.0
  %563 = vmatprep.subr.mxu0 0.0
  %564 = vmatpush1.msra.mxu0 0.0
  %565 = vmatprep.subr.mxu0 0.0
  %566 = vmatpush1.msra.mxu0 0.0
  %567 = vmatprep.subr.mxu0 0.0
  %568 = vmatpush1.msra.mxu0 0.0
  %569 = vmatprep.subr.mxu0 0.0
  %570 = vmatpush1.msra.mxu0 0.0
  %571 = vmatprep.subr.mxu0 0.0
  %572 = vmatpush1.msra.mxu0 0.0
  %573 = vmatprep.subr.mxu0 0.0
  %574 = vmatpush1.msra.mxu0 0.0
  %575 = vmatprep.subr.mxu0 0.0
  %576 = vmatpush1.msra.mxu0 0.0
  %577 = vmatprep.subr.mxu0 0.0
  %578 = vmatpush1.msra.mxu0 0.0
  %579 = vmatprep.subr.mxu0 0.0
  %580 = vmatpush1.msra.mxu0 0.0
  %581 = vmatprep.mubr.f32.mxu0 0.0
  %582 = vmatmul.mubr.f32.gmra.mrb[0].mxu0 0.0
  %v583 = vpop.f32.mrb[0].mxu0
  %v584 = vadd.f32 0.0, %v583
  %v585 = vpop.f32.mrb[0].mxu0
  %v586 = vadd.f32 0.0, %v585
  %587 = vdwg.mxu0
  %v588 = vadd.f32 %v442, %v513
  %v589 = vadd.f32 %v443, %v515
  %v590 = vadd.f32 %v444, %v584
  %v591 = vadd.f32 %v445, %v586
  %v592 = vxor.u32 %v588, 2147483648
  %v593 = vmul.f32 %v592, 1.442695
  %v594 = vpow.pop %v593
  %v595 = vadd.f32 %v594, 1.0
  %v596 = vrcp.pop %v595
  %v597 = vmul.f32 1.0, %v596
  %v598 = vxor.u32 %v589, 2147483648
  %v599 = vmul.f32 %v598, 1.442695
  %v600 = vpow.pop %v599
  %v601 = vadd.f32 %v600, 1.0
  %v602 = vrcp.pop %v601
  %v603 = vmul.f32 1.0, %v602
  %v604 = vtanh.pop %v590
  %v605 = vxor.u32 %v591, 2147483648
  %v606 = vmul.f32 %v605, 1.442695
  %v607 = vpow.pop %v606
  %v608 = vadd.f32 %v607, 1.0
  %v609 = vrcp.pop %v608
  %v610 = vmul.f32 1.0, %v609
  %v611 = vmul.f32 %v603, 0.0
  %v612 = vmul.f32 %v597, %v604
  %v613 = vadd.f32 %v611, %v612
  %v614 = vtanh.pop %v613
  %v615 = vmul.f32 %v610, %v614
  %s616 = smul.u32 1, 4
  %s617 = smul.addr %s616, 8
  %s618 = scalar_lea.vmem [#allocation2], %s617
  %v619 = vld [vmem:[%s618] sm:$0xff]
  %v620 = vld [vmem:[%s618 + $0x8] sm:$0xff]
  %v621 = vld [vmem:[%s618 + $0x10] sm:$0xff]
  %v622 = vld [vmem:[%s618 + $0x18] sm:$0xff]
  %623 = vmatprep.subr.mxu0 %v376
  %624 = vmatpush1.msra.mxu0 %v375
  %625 = vmatprep.subr.mxu0 %v380
  %626 = vmatpush1.msra.mxu0 %v379
  %627 = vmatprep.subr.mxu0 %v384
  %628 = vmatpush1.msra.mxu0 %v383
  %629 = vmatprep.subr.mxu0 %v388
  %630 = vmatpush1.msra.mxu0 %v387
  %631 = vmatprep.subr.mxu0 %v392
  %632 = vmatpush1.msra.mxu0 %v391
  %633 = vmatprep.subr.mxu0 %v396
  %634 = vmatpush1.msra.mxu0 %v395
  %635 = vmatprep.subr.mxu0 %v400
  %636 = vmatpush1.msra.mxu0 %v399
  %637 = vmatprep.subr.mxu0 %v404
  %638 = vmatpush1.msra.mxu0 %v403
  %639 = vmatprep.subr.mxu0 %v408
  %640 = vmatpush1.msra.mxu0 %v407
  %641 = vmatprep.subr.mxu0 %v412
  %642 = vmatpush1.msra.mxu0 %v411
  %643 = vmatprep.subr.mxu0 %v416
  %644 = vmatpush1.msra.mxu0 %v415
  %645 = vmatprep.subr.mxu0 %v420
  %646 = vmatpush1.msra.mxu0 %v419
  %647 = vmatprep.subr.mxu0 %v424
  %648 = vmatpush1.msra.mxu0 %v423
  %649 = vmatprep.subr.mxu0 %v428
  %650 = vmatpush1.msra.mxu0 %v427
  %651 = vmatprep.subr.mxu0 %v432
  %652 = vmatpush1.msra.mxu0 %v431
  %653 = vmatprep.subr.mxu0 %v436
  %654 = vmatpush1.msra.mxu0 %v435
  %655 = vmatprep.subr.mxu0 0.0
  %656 = vmatpush1.msra.mxu0 0.0
  %657 = vmatprep.subr.mxu0 0.0
  %658 = vmatpush1.msra.mxu0 0.0
  %659 = vmatprep.subr.mxu0 0.0
  %660 = vmatpush1.msra.mxu0 0.0
  %661 = vmatprep.subr.mxu0 0.0
  %662 = vmatpush1.msra.mxu0 0.0
  %663 = vmatprep.subr.mxu0 0.0
  %664 = vmatpush1.msra.mxu0 0.0
  %665 = vmatprep.subr.mxu0 0.0
  %666 = vmatpush1.msra.mxu0 0.0
  %667 = vmatprep.subr.mxu0 0.0
  %668 = vmatpush1.msra.mxu0 0.0
  %669 = vmatprep.subr.mxu0 0.0
  %670 = vmatpush1.msra.mxu0 0.0
  %671 = vmatprep.subr.mxu0 0.0
  %672 = vmatpush1.msra.mxu0 0.0
  %673 = vmatprep.subr.mxu0 0.0
  %674 = vmatpush1.msra.mxu0 0.0
  %675 = vmatprep.subr.mxu0 0.0
  %676 = vmatpush1.msra.mxu0 0.0
  %677 = vmatprep.subr.mxu0 0.0
  %678 = vmatpush1.msra.mxu0 0.0
  %679 = vmatprep.subr.mxu0 0.0
  %680 = vmatpush1.msra.mxu0 0.0
  %681 = vmatprep.subr.mxu0 0.0
  %682 = vmatpush1.msra.mxu0 0.0
  %683 = vmatprep.subr.mxu0 0.0
  %684 = vmatpush1.msra.mxu0 0.0
  %685 = vmatprep.subr.mxu0 0.0
  %686 = vmatpush1.msra.mxu0 0.0
  %687 = vmatprep.mubr.f32.mxu0 0.0
  %688 = vmatmul.mubr.f32.gmra.mrb[0].mxu0 %v615
  %v689 = vpop.f32.mrb[0].mxu0
  %v690 = vadd.f32 0.0, %v689
  %v691 = vpop.f32.mrb[0].mxu0
  %v692 = vadd.f32 0.0, %v691
  %693 = vdwg.mxu0
  %694 = vmatprep.subr.mxu0 %v378
  %695 = vmatpush1.msra.mxu0 %v377
  %696 = vmatprep.subr.mxu0 %v382
  %697 = vmatpush1.msra.mxu0 %v381
  %698 = vmatprep.subr.mxu0 %v386
  %699 = vmatpush1.msra.mxu0 %v385
  %700 = vmatprep.subr.mxu0 %v390
  %701 = vmatpush1.msra.mxu0 %v389
  %702 = vmatprep.subr.mxu0 %v394
  %703 = vmatpush1.msra.mxu0 %v393
  %704 = vmatprep.subr.mxu0 %v398
  %705 = vmatpush1.msra.mxu0 %v397
  %706 = vmatprep.subr.mxu0 %v402
  %707 = vmatpush1.msra.mxu0 %v401
  %708 = vmatprep.subr.mxu0 %v406
  %709 = vmatpush1.msra.mxu0 %v405
  %710 = vmatprep.subr.mxu0 %v410
  %711 = vmatpush1.msra.mxu0 %v409
  %712 = vmatprep.subr.mxu0 %v414
  %713 = vmatpush1.msra.mxu0 %v413
  %714 = vmatprep.subr.mxu0 %v418
  %715 = vmatpush1.msra.mxu0 %v417
  %716 = vmatprep.subr.mxu0 %v422
  %717 = vmatpush1.msra.mxu0 %v421
  %718 = vmatprep.subr.mxu0 %v426
  %719 = vmatpush1.msra.mxu0 %v425
  %720 = vmatprep.subr.mxu0 %v430
  %721 = vmatpush1.msra.mxu0 %v429
  %722 = vmatprep.subr.mxu0 %v434
  %723 = vmatpush1.msra.mxu0 %v433
  %724 = vmatprep.subr.mxu0 %v438
  %725 = vmatpush1.msra.mxu0 %v437
  %726 = vmatprep.subr.mxu0 0.0
  %727 = vmatpush1.msra.mxu0 0.0
  %728 = vmatprep.subr.mxu0 0.0
  %729 = vmatpush1.msra.mxu0 0.0
  %730 = vmatprep.subr.mxu0 0.0
  %731 = vmatpush1.msra.mxu0 0.0
  %732 = vmatprep.subr.mxu0 0.0
  %733 = vmatpush1.msra.mxu0 0.0
  %734 = vmatprep.subr.mxu0 0.0
  %735 = vmatpush1.msra.mxu0 0.0
  %736 = vmatprep.subr.mxu0 0.0
  %737 = vmatpush1.msra.mxu0 0.0
  %738 = vmatprep.subr.mxu0 0.0
  %739 = vmatpush1.msra.mxu0 0.0
  %740 = vmatprep.subr.mxu0 0.0
  %741 = vmatpush1.msra.mxu0 0.0
  %742 = vmatprep.subr.mxu0 0.0
  %743 = vmatpush1.msra.mxu0 0.0
  %744 = vmatprep.subr.mxu0 0.0
  %745 = vmatpush1.msra.mxu0 0.0
  %746 = vmatprep.subr.mxu0 0.0
  %747 = vmatpush1.msra.mxu0 0.0
  %748 = vmatprep.subr.mxu0 0.0
  %749 = vmatpush1.msra.mxu0 0.0
  %750 = vmatprep.subr.mxu0 0.0
  %751 = vmatpush1.msra.mxu0 0.0
  %752 = vmatprep.subr.mxu0 0.0
  %753 = vmatpush1.msra.mxu0 0.0
  %754 = vmatprep.subr.mxu0 0.0
  %755 = vmatpush1.msra.mxu0 0.0
  %756 = vmatprep.subr.mxu0 0.0
  %757 = vmatpush1.msra.mxu0 0.0
  %758 = vmatprep.mubr.f32.mxu0 0.0
  %759 = vmatmul.mubr.f32.gmra.mrb[0].mxu0 %v615
  %v760 = vpop.f32.mrb[0].mxu0
  %v761 = vadd.f32 0.0, %v760
  %v762 = vpop.f32.mrb[0].mxu0
  %v763 = vadd.f32 0.0, %v762
  %764 = vdwg.mxu0
  %v765 = vadd.f32 %v619, %v690
  %v766 = vadd.f32 %v620, %v692
  %v767 = vadd.f32 %v621, %v761
  %v768 = vadd.f32 %v622, %v763
  %v769 = vxor.u32 %v765, 2147483648
  %v770 = vmul.f32 %v769, 1.442695
  %v771 = vpow.pop %v770
  %v772 = vadd.f32 %v771, 1.0
  %v773 = vrcp.pop %v772
  %v774 = vmul.f32 1.0, %v773
  %v775 = vxor.u32 %v766, 2147483648
  %v776 = vmul.f32 %v775, 1.442695
  %v777 = vpow.pop %v776
  %v778 = vadd.f32 %v777, 1.0
  %v779 = vrcp.pop %v778
  %v780 = vmul.f32 1.0, %v779
  %v781 = vtanh.pop %v767
  %v782 = vxor.u32 %v768, 2147483648
  %v783 = vmul.f32 %v782, 1.442695
  %v784 = vpow.pop %v783
  %v785 = vadd.f32 %v784, 1.0
  %v786 = vrcp.pop %v785
  %v787 = vmul.f32 1.0, %v786
  %v788 = vmul.f32 %v780, %v613
  %v789 = vmul.f32 %v774, %v781
  %v790 = vadd.f32 %v788, %v789
  %v791 = vtanh.pop %v790
  %v792 = vmul.f32 %v787, %v791
  %s793 = smul.u32 2, 4
  %s794 = smul.addr %s793, 8
  %s795 = scalar_lea.vmem [#allocation2], %s794
  %v796 = vld [vmem:[%s795] sm:$0xff]
  %v797 = vld [vmem:[%s795 + $0x8] sm:$0xff]
  %v798 = vld [vmem:[%s795 + $0x10] sm:$0xff]
  %v799 = vld [vmem:[%s795 + $0x18] sm:$0xff]
  %800 = vmatprep.subr.mxu0 %v376
  %801 = vmatpush1.msra.mxu0 %v375
  %802 = vmatprep.subr.mxu0 %v380
  %803 = vmatpush1.msra.mxu0 %v379
  %804 = vmatprep.subr.mxu0 %v384
  %805 = vmatpush1.msra.mxu0 %v383
  %806 = vmatprep.subr.mxu0 %v388
  %807 = vmatpush1.msra.mxu0 %v387
  %808 = vmatprep.subr.mxu0 %v392
  %809 = vmatpush1.msra.mxu0 %v391
  %810 = vmatprep.subr.mxu0 %v396
  %811 = vmatpush1.msra.mxu0 %v395
  %812 = vmatprep.subr.mxu0 %v400
  %813 = vmatpush1.msra.mxu0 %v399
  %814 = vmatprep.subr.mxu0 %v404
  %815 = vmatpush1.msra.mxu0 %v403
  %816 = vmatprep.subr.mxu0 %v408
  %817 = vmatpush1.msra.mxu0 %v407
  %818 = vmatprep.subr.mxu0 %v412
  %819 = vmatpush1.msra.mxu0 %v411
  %820 = vmatprep.subr.mxu0 %v416
  %821 = vmatpush1.msra.mxu0 %v415
  %822 = vmatprep.subr.mxu0 %v420
  %823 = vmatpush1.msra.mxu0 %v419
  %824 = vmatprep.subr.mxu0 %v424
  %825 = vmatpush1.msra.mxu0 %v423
  %826 = vmatprep.subr.mxu0 %v428
  %827 = vmatpush1.msra.mxu0 %v427
  %828 = vmatprep.subr.mxu0 %v432
  %829 = vmatpush1.msra.mxu0 %v431
  %830 = vmatprep.subr.mxu0 %v436
  %831 = vmatpush1.msra.mxu0 %v435
  %832 = vmatprep.subr.mxu0 0.0
  %833 = vmatpush1.msra.mxu0 0.0
  %834 = vmatprep.subr.mxu0 0.0
  %835 = vmatpush1.msra.mxu0 0.0
  %836 = vmatprep.subr.mxu0 0.0
  %837 = vmatpush1.msra.mxu0 0.0
  %838 = vmatprep.subr.mxu0 0.0
  %839 = vmatpush1.msra.mxu0 0.0
  %840 = vmatprep.subr.mxu0 0.0
  %841 = vmatpush1.msra.mxu0 0.0
  %842 = vmatprep.subr.mxu0 0.0
  %843 = vmatpush1.msra.mxu0 0.0
  %844 = vmatprep.subr.mxu0 0.0
  %845 = vmatpush1.msra.mxu0 0.0
  %846 = vmatprep.subr.mxu0 0.0
  %847 = vmatpush1.msra.mxu0 0.0
  %848 = vmatprep.subr.mxu0 0.0
  %849 = vmatpush1.msra.mxu0 0.0
  %850 = vmatprep.subr.mxu0 0.0
  %851 = vmatpush1.msra.mxu0 0.0
  %852 = vmatprep.subr.mxu0 0.0
  %853 = vmatpush1.msra.mxu0 0.0
  %854 = vmatprep.subr.mxu0 0.0
  %855 = vmatpush1.msra.mxu0 0.0
  %856 = vmatprep.subr.mxu0 0.0
  %857 = vmatpush1.msra.mxu0 0.0
  %858 = vmatprep.subr.mxu0 0.0
  %859 = vmatpush1.msra.mxu0 0.0
  %860 = vmatprep.subr.mxu0 0.0
  %861 = vmatpush1.msra.mxu0 0.0
  %862 = vmatprep.subr.mxu0 0.0
  %863 = vmatpush1.msra.mxu0 0.0
  %864 = vmatprep.mubr.f32.mxu0 0.0
  %865 = vmatmul.mubr.f32.gmra.mrb[0].mxu0 %v792
  %v866 = vpop.f32.mrb[0].mxu0
  %v867 = vadd.f32 0.0, %v866
  %v868 = vpop.f32.mrb[0].mxu0
  %v869 = vadd.f32 0.0, %v868
  %870 = vdwg.mxu0
  %871 = vmatprep.subr.mxu0 %v378
  %872 = vmatpush1.msra.mxu0 %v377
  %873 = vmatprep.subr.mxu0 %v382
  %874 = vmatpush1.msra.mxu0 %v381
  %875 = vmatprep.subr.mxu0 %v386
  %876 = vmatpush1.msra.mxu0 %v385
  %877 = vmatprep.subr.mxu0 %v390
  %878 = vmatpush1.msra.mxu0 %v389
  %879 = vmatprep.subr.mxu0 %v394
  %880 = vmatpush1.msra.mxu0 %v393
  %881 = vmatprep.subr.mxu0 %v398
  %882 = vmatpush1.msra.mxu0 %v397
  %883 = vmatprep.subr.mxu0 %v402
  %884 = vmatpush1.msra.mxu0 %v401
  %885 = vmatprep.subr.mxu0 %v406
  %886 = vmatpush1.msra.mxu0 %v405
  %887 = vmatprep.subr.mxu0 %v410
  %888 = vmatpush1.msra.mxu0 %v409
  %889 = vmatprep.subr.mxu0 %v414
  %890 = vmatpush1.msra.mxu0 %v413
  %891 = vmatprep.subr.mxu0 %v418
  %892 = vmatpush1.msra.mxu0 %v417
  %893 = vmatprep.subr.mxu0 %v422
  %894 = vmatpush1.msra.mxu0 %v421
  %895 = vmatprep.subr.mxu0 %v426
  %896 = vmatpush1.msra.mxu0 %v425
  %897 = vmatprep.subr.mxu0 %v430
  %898 = vmatpush1.msra.mxu0 %v429
  %899 = vmatprep.subr.mxu0 %v434
  %900 = vmatpush1.msra.mxu0 %v433
  %901 = vmatprep.subr.mxu0 %v438
  %902 = vmatpush1.msra.mxu0 %v437
  %903 = vmatprep.subr.mxu0 0.0
  %904 = vmatpush1.msra.mxu0 0.0
  %905 = vmatprep.subr.mxu0 0.0
  %906 = vmatpush1.msra.mxu0 0.0
  %907 = vmatprep.subr.mxu0 0.0
  %908 = vmatpush1.msra.mxu0 0.0
  %909 = vmatprep.subr.mxu0 0.0
  %910 = vmatpush1.msra.mxu0 0.0
  %911 = vmatprep.subr.mxu0 0.0
  %912 = vmatpush1.msra.mxu0 0.0
  %913 = vmatprep.subr.mxu0 0.0
  %914 = vmatpush1.msra.mxu0 0.0
  %915 = vmatprep.subr.mxu0 0.0
  %916 = vmatpush1.msra.mxu0 0.0
  %917 = vmatprep.subr.mxu0 0.0
  %918 = vmatpush1.msra.mxu0 0.0
  %919 = vmatprep.subr.mxu0 0.0
  %920 = vmatpush1.msra.mxu0 0.0
  %921 = vmatprep.subr.mxu0 0.0
  %922 = vmatpush1.msra.mxu0 0.0
  %923 = vmatprep.subr.mxu0 0.0
  %924 = vmatpush1.msra.mxu0 0.0
  %925 = vmatprep.subr.mxu0 0.0
  %926 = vmatpush1.msra.mxu0 0.0
  %927 = vmatprep.subr.mxu0 0.0
  %928 = vmatpush1.msra.mxu0 0.0
  %929 = vmatprep.subr.mxu0 0.0
  %930 = vmatpush1.msra.mxu0 0.0
  %931 = vmatprep.subr.mxu0 0.0
  %932 = vmatpush1.msra.mxu0 0.0
  %933 = vmatprep.subr.mxu0 0.0
  %934 = vmatpush1.msra.mxu0 0.0
  %935 = vmatprep.mubr.f32.mxu0 0.0
  %936 = vmatmul.mubr.f32.gmra.mrb[0].mxu0 %v792
  %v937 = vpop.f32.mrb[0].mxu0
  %v938 = vadd.f32 0.0, %v937
  %v939 = vpop.f32.mrb[0].mxu0
  %v940 = vadd.f32 0.0, %v939
  %941 = vdwg.mxu0
  %v942 = vadd.f32 %v796, %v867
  %v943 = vadd.f32 %v797, %v869
  %v944 = vadd.f32 %v798, %v938
  %v945 = vadd.f32 %v799, %v940
  %v946 = vxor.u32 %v942, 2147483648
  %v947 = vmul.f32 %v946, 1.442695
  %v948 = vpow.pop %v947
  %v949 = vadd.f32 %v948, 1.0
  %v950 = vrcp.pop %v949
  %v951 = vmul.f32 1.0, %v950
  %v952 = vxor.u32 %v943, 2147483648
  %v953 = vmul.f32 %v952, 1.442695
  %v954 = vpow.pop %v953
  %v955 = vadd.f32 %v954, 1.0
  %v956 = vrcp.pop %v955
  %v957 = vmul.f32 1.0, %v956
  %v958 = vtanh.pop %v944
  %v959 = vxor.u32 %v945, 2147483648
  %v960 = vmul.f32 %v959, 1.442695
  %v961 = vpow.pop %v960
  %v962 = vadd.f32 %v961, 1.0
  %v963 = vrcp.pop %v962
  %v964 = vmul.f32 1.0, %v963
  %v965 = vmul.f32 %v957, %v790
  %v966 = vmul.f32 %v951, %v958
  %v967 = vadd.f32 %v965, %v966
  %v968 = vtanh.pop %v967
  %v969 = vmul.f32 %v964, %v968
  %s970 = smul.u32 3, 4
  %s971 = smul.addr %s970, 8
  %s972 = scalar_lea.vmem [#allocation2], %s971
  %v973 = vld [vmem:[%s972] sm:$0xff]
  %v974 = vld [vmem:[%s972 + $0x8] sm:$0xff]
  %v975 = vld [vmem:[%s972 + $0x10] sm:$0xff]
  %v976 = vld [vmem:[%s972 + $0x18] sm:$0xff]
  %977 = vmatprep.subr.mxu0 %v376
  %978 = vmatpush1.msra.mxu0 %v375
  %979 = vmatprep.subr.mxu0 %v380
  %980 = vmatpush1.msra.mxu0 %v379
  %981 = vmatprep.subr.mxu0 %v384
  %982 = vmatpush1.msra.mxu0 %v383
  %983 = vmatprep.subr.mxu0 %v388
  %984 = vmatpush1.msra.mxu0 %v387
  %985 = vmatprep.subr.mxu0 %v392
  %986 = vmatpush1.msra.mxu0 %v391
  %987 = vmatprep.subr.mxu0 %v396
  %988 = vmatpush1.msra.mxu0 %v395
  %989 = vmatprep.subr.mxu0 %v400
  %990 = vmatpush1.msra.mxu0 %v399
  %991 = vmatprep.subr.mxu0 %v404
  %992 = vmatpush1.msra.mxu0 %v403
  %993 = vmatprep.subr.mxu0 %v408
  %994 = vmatpush1.msra.mxu0 %v407
  %995 = vmatprep.subr.mxu0 %v412
  %996 = vmatpush1.msra.mxu0 %v411
  %997 = vmatprep.subr.mxu0 %v416
  %998 = vmatpush1.msra.mxu0 %v415
  %999 = vmatprep.subr.mxu0 %v420
  %1000 = vmatpush1.msra.mxu0 %v419
  %1001 = vmatprep.subr.mxu0 %v424
  %1002 = vmatpush1.msra.mxu0 %v423
  %1003 = vmatprep.subr.mxu0 %v428
  %1004 = vmatpush1.msra.mxu0 %v427
  %1005 = vmatprep.subr.mxu0 %v432
  %1006 = vmatpush1.msra.mxu0 %v431
  %1007 = vmatprep.subr.mxu0 %v436
  %1008 = vmatpush1.msra.mxu0 %v435
  %1009 = vmatprep.subr.mxu0 0.0
  %1010 = vmatpush1.msra.mxu0 0.0
  %1011 = vmatprep.subr.mxu0 0.0
  %1012 = vmatpush1.msra.mxu0 0.0
  %1013 = vmatprep.subr.mxu0 0.0
  %1014 = vmatpush1.msra.mxu0 0.0
  %1015 = vmatprep.subr.mxu0 0.0
  %1016 = vmatpush1.msra.mxu0 0.0
  %1017 = vmatprep.subr.mxu0 0.0
  %1018 = vmatpush1.msra.mxu0 0.0
  %1019 = vmatprep.subr.mxu0 0.0
  %1020 = vmatpush1.msra.mxu0 0.0
  %1021 = vmatprep.subr.mxu0 0.0
  %1022 = vmatpush1.msra.mxu0 0.0
  %1023 = vmatprep.subr.mxu0 0.0
  %1024 = vmatpush1.msra.mxu0 0.0
  %1025 = vmatprep.subr.mxu0 0.0
  %1026 = vmatpush1.msra.mxu0 0.0
  %1027 = vmatprep.subr.mxu0 0.0
  %1028 = vmatpush1.msra.mxu0 0.0
  %1029 = vmatprep.subr.mxu0 0.0
  %1030 = vmatpush1.msra.mxu0 0.0
  %1031 = vmatprep.subr.mxu0 0.0
  %1032 = vmatpush1.msra.mxu0 0.0
  %1033 = vmatprep.subr.mxu0 0.0
  %1034 = vmatpush1.msra.mxu0 0.0
  %1035 = vmatprep.subr.mxu0 0.0
  %1036 = vmatpush1.msra.mxu0 0.0
  %1037 = vmatprep.subr.mxu0 0.0
  %1038 = vmatpush1.msra.mxu0 0.0
  %1039 = vmatprep.subr.mxu0 0.0
  %1040 = vmatpush1.msra.mxu0 0.0
  %1041 = vmatprep.mubr.f32.mxu0 0.0
  %1042 = vmatmul.mubr.f32.gmra.mrb[0].mxu0 %v969
  %v1043 = vpop.f32.mrb[0].mxu0
  %v1044 = vadd.f32 0.0, %v1043
  %v1045 = vpop.f32.mrb[0].mxu0
  %v1046 = vadd.f32 0.0, %v1045
  %1047 = vdwg.mxu0
  %1048 = vmatprep.subr.mxu0 %v378
  %1049 = vmatpush1.msra.mxu0 %v377
  %1050 = vmatprep.subr.mxu0 %v382
  %1051 = vmatpush1.msra.mxu0 %v381
  %1052 = vmatprep.subr.mxu0 %v386
  %1053 = vmatpush1.msra.mxu0 %v385
  %1054 = vmatprep.subr.mxu0 %v390
  %1055 = vmatpush1.msra.mxu0 %v389
  %1056 = vmatprep.subr.mxu0 %v394
  %1057 = vmatpush1.msra.mxu0 %v393
  %1058 = vmatprep.subr.mxu0 %v398
  %1059 = vmatpush1.msra.mxu0 %v397
  %1060 = vmatprep.subr.mxu0 %v402
  %1061 = vmatpush1.msra.mxu0 %v401
  %1062 = vmatprep.subr.mxu0 %v406
  %1063 = vmatpush1.msra.mxu0 %v405
  %1064 = vmatprep.subr.mxu0 %v410
  %1065 = vmatpush1.msra.mxu0 %v409
  %1066 = vmatprep.subr.mxu0 %v414
  %1067 = vmatpush1.msra.mxu0 %v413
  %1068 = vmatprep.subr.mxu0 %v418
  %1069 = vmatpush1.msra.mxu0 %v417
  %1070 = vmatprep.subr.mxu0 %v422
  %1071 = vmatpush1.msra.mxu0 %v421
  %1072 = vmatprep.subr.mxu0 %v426
  %1073 = vmatpush1.msra.mxu0 %v425
  %1074 = vmatprep.subr.mxu0 %v430
  %1075 = vmatpush1.msra.mxu0 %v429
  %1076 = vmatprep.subr.mxu0 %v434
  %1077 = vmatpush1.msra.mxu0 %v433
  %1078 = vmatprep.subr.mxu0 %v438
  %1079 = vmatpush1.msra.mxu0 %v437
  %1080 = vmatprep.subr.mxu0 0.0
  %1081 = vmatpush1.msra.mxu0 0.0
  %1082 = vmatprep.subr.mxu0 0.0
  %1083 = vmatpush1.msra.mxu0 0.0
  %1084 = vmatprep.subr.mxu0 0.0
  %1085 = vmatpush1.msra.mxu0 0.0
  %1086 = vmatprep.subr.mxu0 0.0
  %1087 = vmatpush1.msra.mxu0 0.0
  %1088 = vmatprep.subr.mxu0 0.0
  %1089 = vmatpush1.msra.mxu0 0.0
  %1090 = vmatprep.subr.mxu0 0.0
  %1091 = vmatpush1.msra.mxu0 0.0
  %1092 = vmatprep.subr.mxu0 0.0
  %1093 = vmatpush1.msra.mxu0 0.0
  %1094 = vmatprep.subr.mxu0 0.0
  %1095 = vmatpush1.msra.mxu0 0.0
  %1096 = vmatprep.subr.mxu0 0.0
  %1097 = vmatpush1.msra.mxu0 0.0
  %1098 = vmatprep.subr.mxu0 0.0
  %1099 = vmatpush1.msra.mxu0 0.0
  %1100 = vmatprep.subr.mxu0 0.0
  %1101 = vmatpush1.msra.mxu0 0.0
  %1102 = vmatprep.subr.mxu0 0.0
  %1103 = vmatpush1.msra.mxu0 0.0
  %1104 = vmatprep.subr.mxu0 0.0
  %1105 = vmatpush1.msra.mxu0 0.0
  %1106 = vmatprep.subr.mxu0 0.0
  %1107 = vmatpush1.msra.mxu0 0.0
  %1108 = vmatprep.subr.mxu0 0.0
  %1109 = vmatpush1.msra.mxu0 0.0
  %1110 = vmatprep.subr.mxu0 0.0
  %1111 = vmatpush1.msra.mxu0 0.0
  %1112 = vmatprep.mubr.f32.mxu0 0.0
  %1113 = vmatmul.mubr.f32.gmra.mrb[0].mxu0 %v969
  %v1114 = vpop.f32.mrb[0].mxu0
  %v1115 = vadd.f32 0.0, %v1114
  %v1116 = vpop.f32.mrb[0].mxu0
  %v1117 = vadd.f32 0.0, %v1116
  %1118 = vdwg.mxu0
  %v1119 = vadd.f32 %v973, %v1044
  %v1120 = vadd.f32 %v974, %v1046
  %v1121 = vadd.f32 %v975, %v1115
  %v1122 = vadd.f32 %v976, %v1117
  %v1123 = vxor.u32 %v1119, 2147483648
  %v1124 = vmul.f32 %v1123, 1.442695
  %v1125 = vpow.pop %v1124
  %v1126 = vadd.f32 %v1125, 1.0
  %v1127 = vrcp.pop %v1126
  %v1128 = vmul.f32 1.0, %v1127
  %v1129 = vxor.u32 %v1120, 2147483648
  %v1130 = vmul.f32 %v1129, 1.442695
  %v1131 = vpow.pop %v1130
  %v1132 = vadd.f32 %v1131, 1.0
  %v1133 = vrcp.pop %v1132
  %v1134 = vmul.f32 1.0, %v1133
  %v1135 = vtanh.pop %v1121
  %v1136 = vxor.u32 %v1122, 2147483648
  %v1137 = vmul.f32 %v1136, 1.442695
  %v1138 = vpow.pop %v1137
  %v1139 = vadd.f32 %v1138, 1.0
  %v1140 = vrcp.pop %v1139
  %v1141 = vmul.f32 1.0, %v1140
  %v1142 = vmul.f32 %v1134, %v967
  %v1143 = vmul.f32 %v1128, %v1135
  %v1144 = vadd.f32 %v1142, %v1143
  %v1145 = vtanh.pop %v1144
  %v1146 = vmul.f32 %v1141, %v1145
  %s1147 = smul.u32 4, 4
  %s1148 = smul.addr %s1147, 8
  %s1149 = scalar_lea.vmem [#allocation2], %s1148
  %v1150 = vld [vmem:[%s1149] sm:$0xff]
  %v1151 = vld [vmem:[%s1149 + $0x8] sm:$0xff]
  %v1152 = vld [vmem:[%s1149 + $0x10] sm:$0xff]
  %v1153 = vld [vmem:[%s1149 + $0x18] sm:$0xff]
  %1154 = vmatprep.subr.mxu0 %v376
  %1155 = vmatpush1.msra.mxu0 %v375
  %1156 = vmatprep.subr.mxu0 %v380
  %1157 = vmatpush1.msra.mxu0 %v379
  %1158 = vmatprep.subr.mxu0 %v384
  %1159 = vmatpush1.msra.mxu0 %v383
  %1160 = vmatprep.subr.mxu0 %v388
  %1161 = vmatpush1.msra.mxu0 %v387
  %1162 = vmatprep.subr.mxu0 %v392
  %1163 = vmatpush1.msra.mxu0 %v391
  %1164 = vmatprep.subr.mxu0 %v396
  %1165 = vmatpush1.msra.mxu0 %v395
  %1166 = vmatprep.subr.mxu0 %v400
  %1167 = vmatpush1.msra.mxu0 %v399
  %1168 = vmatprep.subr.mxu0 %v404
  %1169 = vmatpush1.msra.mxu0 %v403
  %1170 = vmatprep.subr.mxu0 %v408
  %1171 = vmatpush1.msra.mxu0 %v407
  %1172 = vmatprep.subr.mxu0 %v412
  %1173 = vmatpush1.msra.mxu0 %v411
  %1174 = vmatprep.subr.mxu0 %v416
  %1175 = vmatpush1.msra.mxu0 %v415
  %1176 = vmatprep.subr.mxu0 %v420
  %1177 = vmatpush1.msra.mxu0 %v419
  %1178 = vmatprep.subr.mxu0 %v424
  %1179 = vmatpush1.msra.mxu0 %v423
  %1180 = vmatprep.subr.mxu0 %v428
  %1181 = vmatpush1.msra.mxu0 %v427
  %1182 = vmatprep.subr.mxu0 %v432
  %1183 = vmatpush1.msra.mxu0 %v431
  %1184 = vmatprep.subr.mxu0 %v436
  %1185 = vmatpush1.msra.mxu0 %v435
  %1186 = vmatprep.subr.mxu0 0.0
  %1187 = vmatpush1.msra.mxu0 0.0
  %1188 = vmatprep.subr.mxu0 0.0
  %1189 = vmatpush1.msra.mxu0 0.0
  %1190 = vmatprep.subr.mxu0 0.0
  %1191 = vmatpush1.msra.mxu0 0.0
  %1192 = vmatprep.subr.mxu0 0.0
  %1193 = vmatpush1.msra.mxu0 0.0
  %1194 = vmatprep.subr.mxu0 0.0
  %1195 = vmatpush1.msra.mxu0 0.0
  %1196 = vmatprep.subr.mxu0 0.0
  %1197 = vmatpush1.msra.mxu0 0.0
  %1198 = vmatprep.subr.mxu0 0.0
  %1199 = vmatpush1.msra.mxu0 0.0
  %1200 = vmatprep.subr.mxu0 0.0
  %1201 = vmatpush1.msra.mxu0 0.0
  %1202 = vmatprep.subr.mxu0 0.0
  %1203 = vmatpush1.msra.mxu0 0.0
  %1204 = vmatprep.subr.mxu0 0.0
  %1205 = vmatpush1.msra.mxu0 0.0
  %1206 = vmatprep.subr.mxu0 0.0
  %1207 = vmatpush1.msra.mxu0 0.0
  %1208 = vmatprep.subr.mxu0 0.0
  %1209 = vmatpush1.msra.mxu0 0.0
  %1210 = vmatprep.subr.mxu0 0.0
  %1211 = vmatpush1.msra.mxu0 0.0
  %1212 = vmatprep.subr.mxu0 0.0
  %1213 = vmatpush1.msra.mxu0 0.0
  %1214 = vmatprep.subr.mxu0 0.0
  %1215 = vmatpush1.msra.mxu0 0.0
  %1216 = vmatprep.subr.mxu0 0.0
  %1217 = vmatpush1.msra.mxu0 0.0
  %1218 = vmatprep.mubr.f32.mxu0 0.0
  %1219 = vmatmul.mubr.f32.gmra.mrb[0].mxu0 %v1146
  %v1220 = vpop.f32.mrb[0].mxu0
  %v1221 = vadd.f32 0.0, %v1220
  %v1222 = vpop.f32.mrb[0].mxu0
  %v1223 = vadd.f32 0.0, %v1222
  %1224 = vdwg.mxu0
  %1225 = vmatprep.subr.mxu0 %v378
  %1226 = vmatpush1.msra.mxu0 %v377
  %1227 = vmatprep.subr.mxu0 %v382
  %1228 = vmatpush1.msra.mxu0 %v381
  %1229 = vmatprep.subr.mxu0 %v386
  %1230 = vmatpush1.msra.mxu0 %v385
  %1231 = vmatprep.subr.mxu0 %v390
  %1232 = vmatpush1.msra.mxu0 %v389
  %1233 = vmatprep.subr.mxu0 %v394
  %1234 = vmatpush1.msra.mxu0 %v393
  %1235 = vmatprep.subr.mxu0 %v398
  %1236 = vmatpush1.msra.mxu0 %v397
  %1237 = vmatprep.subr.mxu0 %v402
  %1238 = vmatpush1.msra.mxu0 %v401
  %1239 = vmatprep.subr.mxu0 %v406
  %1240 = vmatpush1.msra.mxu0 %v405
  %1241 = vmatprep.subr.mxu0 %v410
  %1242 = vmatpush1.msra.mxu0 %v409
  %1243 = vmatprep.subr.mxu0 %v414
  %1244 = vmatpush1.msra.mxu0 %v413
  %1245 = vmatprep.subr.mxu0 %v418
  %1246 = vmatpush1.msra.mxu0 %v417
  %1247 = vmatprep.subr.mxu0 %v422
  %1248 = vmatpush1.msra.mxu0 %v421
  %1249 = vmatprep.subr.mxu0 %v426
  %1250 = vmatpush1.msra.mxu0 %v425
  %1251 = vmatprep.subr.mxu0 %v430
  %1252 = vmatpush1.msra.mxu0 %v429
  %1253 = vmatprep.subr.mxu0 %v434
  %1254 = vmatpush1.msra.mxu0 %v433
  %1255 = vmatprep.subr.mxu0 %v438
  %1256 = vmatpush1.msra.mxu0 %v437
  %1257 = vmatprep.subr.mxu0 0.0
  %1258 = vmatpush1.msra.mxu0 0.0
  %1259 = vmatprep.subr.mxu0 0.0
  %1260 = vmatpush1.msra.mxu0 0.0
  %1261 = vmatprep.subr.mxu0 0.0
  %1262 = vmatpush1.msra.mxu0 0.0
  %1263 = vmatprep.subr.mxu0 0.0
  %1264 = vmatpush1.msra.mxu0 0.0
  %1265 = vmatprep.subr.mxu0 0.0
  %1266 = vmatpush1.msra.mxu0 0.0
  %1267 = vmatprep.subr.mxu0 0.0
  %1268 = vmatpush1.msra.mxu0 0.0
  %1269 = vmatprep.subr.mxu0 0.0
  %1270 = vmatpush1.msra.mxu0 0.0
  %1271 = vmatprep.subr.mxu0 0.0
  %1272 = vmatpush1.msra.mxu0 0.0
  %1273 = vmatprep.subr.mxu0 0.0
  %1274 = vmatpush1.msra.mxu0 0.0
  %1275 = vmatprep.subr.mxu0 0.0
  %1276 = vmatpush1.msra.mxu0 0.0
  %1277 = vmatprep.subr.mxu0 0.0
  %1278 = vmatpush1.msra.mxu0 0.0
  %1279 = vmatprep.subr.mxu0 0.0
  %1280 = vmatpush1.msra.mxu0 0.0
  %1281 = vmatprep.subr.mxu0 0.0
  %1282 = vmatpush1.msra.mxu0 0.0
  %1283 = vmatprep.subr.mxu0 0.0
  %1284 = vmatpush1.msra.mxu0 0.0
  %1285 = vmatprep.subr.mxu0 0.0
  %1286 = vmatpush1.msra.mxu0 0.0
  %1287 = vmatprep.subr.mxu0 0.0
  %1288 = vmatpush1.msra.mxu0 0.0
  %1289 = vmatprep.mubr.f32.mxu0 0.0
  %1290 = vmatmul.mubr.f32.gmra.mrb[0].mxu0 %v1146
  %v1291 = vpop.f32.mrb[0].mxu0
  %v1292 = vadd.f32 0.0, %v1291
  %v1293 = vpop.f32.mrb[0].mxu0
  %v1294 = vadd.f32 0.0, %v1293
  %1295 = vdwg.mxu0
  %v1296 = vadd.f32 %v1150, %v1221
  %v1297 = vadd.f32 %v1151, %v1223
  %v1298 = vadd.f32 %v1152, %v1292
  %v1299 = vadd.f32 %v1153, %v1294
  %v1300 = vxor.u32 %v1296, 2147483648
  %v1301 = vmul.f32 %v1300, 1.442695
  %v1302 = vpow.pop %v1301
  %v1303 = vadd.f32 %v1302, 1.0
  %v1304 = vrcp.pop %v1303
  %v1305 = vmul.f32 1.0, %v1304
  %v1306 = vxor.u32 %v1297, 2147483648
  %v1307 = vmul.f32 %v1306, 1.442695
  %v1308 = vpow.pop %v1307
  %v1309 = vadd.f32 %v1308, 1.0
  %v1310 = vrcp.pop %v1309
  %v1311 = vmul.f32 1.0, %v1310
  %v1312 = vtanh.pop %v1298
  %v1313 = vxor.u32 %v1299, 2147483648
  %v1314 = vmul.f32 %v1313, 1.442695
  %v1315 = vpow.pop %v1314
  %v1316 = vadd.f32 %v1315, 1.0
  %v1317 = vrcp.pop %v1316
  %v1318 = vmul.f32 1.0, %v1317
  %v1319 = vmul.f32 %v1311, %v1144
  %v1320 = vmul.f32 %v1305, %v1312
  %v1321 = vadd.f32 %v1319, %v1320
  %v1322 = vtanh.pop %v1321
  %v1323 = vmul.f32 %v1318, %v1322
  %s1324 = smul.u32 5, 4
  %s1325 = smul.addr %s1324, 8
  %s1326 = scalar_lea.vmem [#allocation2], %s1325
  %v1327 = vld [vmem:[%s1326] sm:$0xff]
  %v1328 = vld [vmem:[%s1326 + $0x8] sm:$0xff]
  %v1329 = vld [vmem:[%s1326 + $0x10] sm:$0xff]
  %v1330 = vld [vmem:[%s1326 + $0x18] sm:$0xff]
  %1331 = vmatprep.subr.mxu0 %v376
  %1332 = vmatpush1.msra.mxu0 %v375
  %1333 = vmatprep.subr.mxu0 %v380
  %1334 = vmatpush1.msra.mxu0 %v379
  %1335 = vmatprep.subr.mxu0 %v384
  %1336 = vmatpush1.msra.mxu0 %v383
  %1337 = vmatprep.subr.mxu0 %v388
  %1338 = vmatpush1.msra.mxu0 %v387
  %1339 = vmatprep.subr.mxu0 %v392
  %1340 = vmatpush1.msra.mxu0 %v391
  %1341 = vmatprep.subr.mxu0 %v396
  %1342 = vmatpush1.msra.mxu0 %v395
  %1343 = vmatprep.subr.mxu0 %v400
  %1344 = vmatpush1.msra.mxu0 %v399
  %1345 = vmatprep.subr.mxu0 %v404
  %1346 = vmatpush1.msra.mxu0 %v403
  %1347 = vmatprep.subr.mxu0 %v408
  %1348 = vmatpush1.msra.mxu0 %v407
  %1349 = vmatprep.subr.mxu0 %v412
  %1350 = vmatpush1.msra.mxu0 %v411
  %1351 = vmatprep.subr.mxu0 %v416
  %1352 = vmatpush1.msra.mxu0 %v415
  %1353 = vmatprep.subr.mxu0 %v420
  %1354 = vmatpush1.msra.mxu0 %v419
  %1355 = vmatprep.subr.mxu0 %v424
  %1356 = vmatpush1.msra.mxu0 %v423
  %1357 = vmatprep.subr.mxu0 %v428
  %1358 = vmatpush1.msra.mxu0 %v427
  %1359 = vmatprep.subr.mxu0 %v432
  %1360 = vmatpush1.msra.mxu0 %v431
  %1361 = vmatprep.subr.mxu0 %v436
  %1362 = vmatpush1.msra.mxu0 %v435
  %1363 = vmatprep.subr.mxu0 0.0
  %1364 = vmatpush1.msra.mxu0 0.0
  %1365 = vmatprep.subr.mxu0 0.0
  %1366 = vmatpush1.msra.mxu0 0.0
  %1367 = vmatprep.subr.mxu0 0.0
  %1368 = vmatpush1.msra.mxu0 0.0
  %1369 = vmatprep.subr.mxu0 0.0
  %1370 = vmatpush1.msra.mxu0 0.0
  %1371 = vmatprep.subr.mxu0 0.0
  %1372 = vmatpush1.msra.mxu0 0.0
  %1373 = vmatprep.subr.mxu0 0.0
  %1374 = vmatpush1.msra.mxu0 0.0
  %1375 = vmatprep.subr.mxu0 0.0
  %1376 = vmatpush1.msra.mxu0 0.0
  %1377 = vmatprep.subr.mxu0 0.0
  %1378 = vmatpush1.msra.mxu0 0.0
  %1379 = vmatprep.subr.mxu0 0.0
  %1380 = vmatpush1.msra.mxu0 0.0
  %1381 = vmatprep.subr.mxu0 0.0
  %1382 = vmatpush1.msra.mxu0 0.0
  %1383 = vmatprep.subr.mxu0 0.0
  %1384 = vmatpush1.msra.mxu0 0.0
  %1385 = vmatprep.subr.mxu0 0.0
  %1386 = vmatpush1.msra.mxu0 0.0
  %1387 = vmatprep.subr.mxu0 0.0
  %1388 = vmatpush1.msra.mxu0 0.0
  %1389 = vmatprep.subr.mxu0 0.0
  %1390 = vmatpush1.msra.mxu0 0.0
  %1391 = vmatprep.subr.mxu0 0.0
  %1392 = vmatpush1.msra.mxu0 0.0
  %1393 = vmatprep.subr.mxu0 0.0
  %1394 = vmatpush1.msra.mxu0 0.0
  %1395 = vmatprep.mubr.f32.mxu0 0.0
  %1396 = vmatmul.mubr.f32.gmra.mrb[0].mxu0 %v1323
  %v1397 = vpop.f32.mrb[0].mxu0
  %v1398 = vadd.f32 0.0, %v1397
  %v1399 = vpop.f32.mrb[0].mxu0
  %v1400 = vadd.f32 0.0, %v1399
  %1401 = vdwg.mxu0
  %1402 = vmatprep.subr.mxu0 %v378
  %1403 = vmatpush1.msra.mxu0 %v377
  %1404 = vmatprep.subr.mxu0 %v382
  %1405 = vmatpush1.msra.mxu0 %v381
  %1406 = vmatprep.subr.mxu0 %v386
  %1407 = vmatpush1.msra.mxu0 %v385
  %1408 = vmatprep.subr.mxu0 %v390
  %1409 = vmatpush1.msra.mxu0 %v389
  %1410 = vmatprep.subr.mxu0 %v394
  %1411 = vmatpush1.msra.mxu0 %v393
  %1412 = vmatprep.subr.mxu0 %v398
  %1413 = vmatpush1.msra.mxu0 %v397
  %1414 = vmatprep.subr.mxu0 %v402
  %1415 = vmatpush1.msra.mxu0 %v401
  %1416 = vmatprep.subr.mxu0 %v406
  %1417 = vmatpush1.msra.mxu0 %v405
  %1418 = vmatprep.subr.mxu0 %v410
  %1419 = vmatpush1.msra.mxu0 %v409
  %1420 = vmatprep.subr.mxu0 %v414
  %1421 = vmatpush1.msra.mxu0 %v413
  %1422 = vmatprep.subr.mxu0 %v418
  %1423 = vmatpush1.msra.mxu0 %v417
  %1424 = vmatprep.subr.mxu0 %v422
  %1425 = vmatpush1.msra.mxu0 %v421
  %1426 = vmatprep.subr.mxu0 %v426
  %1427 = vmatpush1.msra.mxu0 %v425
  %1428 = vmatprep.subr.mxu0 %v430
  %1429 = vmatpush1.msra.mxu0 %v429
  %1430 = vmatprep.subr.mxu0 %v434
  %1431 = vmatpush1.msra.mxu0 %v433
  %1432 = vmatprep.subr.mxu0 %v438
  %1433 = vmatpush1.msra.mxu0 %v437
  %1434 = vmatprep.subr.mxu0 0.0
  %1435 = vmatpush1.msra.mxu0 0.0
  %1436 = vmatprep.subr.mxu0 0.0
  %1437 = vmatpush1.msra.mxu0 0.0
  %1438 = vmatprep.subr.mxu0 0.0
  %1439 = vmatpush1.msra.mxu0 0.0
  %1440 = vmatprep.subr.mxu0 0.0
  %1441 = vmatpush1.msra.mxu0 0.0
  %1442 = vmatprep.subr.mxu0 0.0
  %1443 = vmatpush1.msra.mxu0 0.0
  %1444 = vmatprep.subr.mxu0 0.0
  %1445 = vmatpush1.msra.mxu0 0.0
  %1446 = vmatprep.subr.mxu0 0.0
  %1447 = vmatpush1.msra.mxu0 0.0
  %1448 = vmatprep.subr.mxu0 0.0
  %1449 = vmatpush1.msra.mxu0 0.0
  %1450 = vmatprep.subr.mxu0 0.0
  %1451 = vmatpush1.msra.mxu0 0.0
  %1452 = vmatprep.subr.mxu0 0.0
  %1453 = vmatpush1.msra.mxu0 0.0
  %1454 = vmatprep.subr.mxu0 0.0
  %1455 = vmatpush1.msra.mxu0 0.0
  %1456 = vmatprep.subr.mxu0 0.0
  %1457 = vmatpush1.msra.mxu0 0.0
  %1458 = vmatprep.subr.mxu0 0.0
  %1459 = vmatpush1.msra.mxu0 0.0
  %1460 = vmatprep.subr.mxu0 0.0
  %1461 = vmatpush1.msra.mxu0 0.0
  %1462 = vmatprep.subr.mxu0 0.0
  %1463 = vmatpush1.msra.mxu0 0.0
  %1464 = vmatprep.subr.mxu0 0.0
  %1465 = vmatpush1.msra.mxu0 0.0
  %1466 = vmatprep.mubr.f32.mxu0 0.0
  %1467 = vmatmul.mubr.f32.gmra.mrb[0].mxu0 %v1323
  %v1468 = vpop.f32.mrb[0].mxu0
  %v1469 = vadd.f32 0.0, %v1468
  %v1470 = vpop.f32.mrb[0].mxu0
  %v1471 = vadd.f32 0.0, %v1470
  %1472 = vdwg.mxu0
  %v1473 = vadd.f32 %v1327, %v1398
  %v1474 = vadd.f32 %v1328, %v1400
  %v1475 = vadd.f32 %v1329, %v1469
  %v1476 = vadd.f32 %v1330, %v1471
  %v1477 = vxor.u32 %v1473, 2147483648
  %v1478 = vmul.f32 %v1477, 1.442695
  %v1479 = vpow.pop %v1478
  %v1480 = vadd.f32 %v1479, 1.0
  %v1481 = vrcp.pop %v1480
  %v1482 = vmul.f32 1.0, %v1481
  %v1483 = vxor.u32 %v1474, 2147483648
  %v1484 = vmul.f32 %v1483, 1.442695
  %v1485 = vpow.pop %v1484
  %v1486 = vadd.f32 %v1485, 1.0
  %v1487 = vrcp.pop %v1486
  %v1488 = vmul.f32 1.0, %v1487
  %v1489 = vtanh.pop %v1475
  %v1490 = vxor.u32 %v1476, 2147483648
  %v1491 = vmul.f32 %v1490, 1.442695
  %v1492 = vpow.pop %v1491
  %v1493 = vadd.f32 %v1492, 1.0
  %v1494 = vrcp.pop %v1493
  %v1495 = vmul.f32 1.0, %v1494
  %v1496 = vmul.f32 %v1488, %v1321
  %v1497 = vmul.f32 %v1482, %v1489
  %v1498 = vadd.f32 %v1496, %v1497
  %v1499 = vtanh.pop %v1498
  %v1500 = vmul.f32 %v1495, %v1499
  %s1501 = smul.u32 6, 4
  %s1502 = smul.addr %s1501, 8
  %s1503 = scalar_lea.vmem [#allocation2], %s1502
  %v1504 = vld [vmem:[%s1503] sm:$0xff]
  %v1505 = vld [vmem:[%s1503 + $0x8] sm:$0xff]
  %v1506 = vld [vmem:[%s1503 + $0x10] sm:$0xff]
  %v1507 = vld [vmem:[%s1503 + $0x18] sm:$0xff]
  %1508 = vmatprep.subr.mxu0 %v376
  %1509 = vmatpush1.msra.mxu0 %v375
  %1510 = vmatprep.subr.mxu0 %v380
  %1511 = vmatpush1.msra.mxu0 %v379
  %1512 = vmatprep.subr.mxu0 %v384
  %1513 = vmatpush1.msra.mxu0 %v383
  %1514 = vmatprep.subr.mxu0 %v388
  %1515 = vmatpush1.msra.mxu0 %v387
  %1516 = vmatprep.subr.mxu0 %v392
  %1517 = vmatpush1.msra.mxu0 %v391
  %1518 = vmatprep.subr.mxu0 %v396
  %1519 = vmatpush1.msra.mxu0 %v395
  %1520 = vmatprep.subr.mxu0 %v400
  %1521 = vmatpush1.msra.mxu0 %v399
  %1522 = vmatprep.subr.mxu0 %v404
  %1523 = vmatpush1.msra.mxu0 %v403
  %1524 = vmatprep.subr.mxu0 %v408
  %1525 = vmatpush1.msra.mxu0 %v407
  %1526 = vmatprep.subr.mxu0 %v412
  %1527 = vmatpush1.msra.mxu0 %v411
  %1528 = vmatprep.subr.mxu0 %v416
  %1529 = vmatpush1.msra.mxu0 %v415
  %1530 = vmatprep.subr.mxu0 %v420
  %1531 = vmatpush1.msra.mxu0 %v419
  %1532 = vmatprep.subr.mxu0 %v424
  %1533 = vmatpush1.msra.mxu0 %v423
  %1534 = vmatprep.subr.mxu0 %v428
  %1535 = vmatpush1.msra.mxu0 %v427
  %1536 = vmatprep.subr.mxu0 %v432
  %1537 = vmatpush1.msra.mxu0 %v431
  %1538 = vmatprep.subr.mxu0 %v436
  %1539 = vmatpush1.msra.mxu0 %v435
  %1540 = vmatprep.subr.mxu0 0.0
  %1541 = vmatpush1.msra.mxu0 0.0
  %1542 = vmatprep.subr.mxu0 0.0
  %1543 = vmatpush1.msra.mxu0 0.0
  %1544 = vmatprep.subr.mxu0 0.0
  %1545 = vmatpush1.msra.mxu0 0.0
  %1546 = vmatprep.subr.mxu0 0.0
  %1547 = vmatpush1.msra.mxu0 0.0
  %1548 = vmatprep.subr.mxu0 0.0
  %1549 = vmatpush1.msra.mxu0 0.0
  %1550 = vmatprep.subr.mxu0 0.0
  %1551 = vmatpush1.msra.mxu0 0.0
  %1552 = vmatprep.subr.mxu0 0.0
  %1553 = vmatpush1.msra.mxu0 0.0
  %1554 = vmatprep.subr.mxu0 0.0
  %1555 = vmatpush1.msra.mxu0 0.0
  %1556 = vmatprep.subr.mxu0 0.0
  %1557 = vmatpush1.msra.mxu0 0.0
  %1558 = vmatprep.subr.mxu0 0.0
  %1559 = vmatpush1.msra.mxu0 0.0
  %1560 = vmatprep.subr.mxu0 0.0
  %1561 = vmatpush1.msra.mxu0 0.0
  %1562 = vmatprep.subr.mxu0 0.0
  %1563 = vmatpush1.msra.mxu0 0.0
  %1564 = vmatprep.subr.mxu0 0.0
  %1565 = vmatpush1.msra.mxu0 0.0
  %1566 = vmatprep.subr.mxu0 0.0
  %1567 = vmatpush1.msra.mxu0 0.0
  %1568 = vmatprep.subr.mxu0 0.0
  %1569 = vmatpush1.msra.mxu0 0.0
  %1570 = vmatprep.subr.mxu0 0.0
  %1571 = vmatpush1.msra.mxu0 0.0
  %1572 = vmatprep.mubr.f32.mxu0 0.0
  %1573 = vmatmul.mubr.f32.gmra.mrb[0].mxu0 %v1500
  %v1574 = vpop.f32.mrb[0].mxu0
  %v1575 = vadd.f32 0.0, %v1574
  %v1576 = vpop.f32.mrb[0].mxu0
  %v1577 = vadd.f32 0.0, %v1576
  %1578 = vdwg.mxu0
  %1579 = vmatprep.subr.mxu0 %v378
  %1580 = vmatpush1.msra.mxu0 %v377
  %1581 = vmatprep.subr.mxu0 %v382
  %1582 = vmatpush1.msra.mxu0 %v381
  %1583 = vmatprep.subr.mxu0 %v386
  %1584 = vmatpush1.msra.mxu0 %v385
  %1585 = vmatprep.subr.mxu0 %v390
  %1586 = vmatpush1.msra.mxu0 %v389
  %1587 = vmatprep.subr.mxu0 %v394
  %1588 = vmatpush1.msra.mxu0 %v393
  %1589 = vmatprep.subr.mxu0 %v398
  %1590 = vmatpush1.msra.mxu0 %v397
  %1591 = vmatprep.subr.mxu0 %v402
  %1592 = vmatpush1.msra.mxu0 %v401
  %1593 = vmatprep.subr.mxu0 %v406
  %1594 = vmatpush1.msra.mxu0 %v405
  %1595 = vmatprep.subr.mxu0 %v410
  %1596 = vmatpush1.msra.mxu0 %v409
  %1597 = vmatprep.subr.mxu0 %v414
  %1598 = vmatpush1.msra.mxu0 %v413
  %1599 = vmatprep.subr.mxu0 %v418
  %1600 = vmatpush1.msra.mxu0 %v417
  %1601 = vmatprep.subr.mxu0 %v422
  %1602 = vmatpush1.msra.mxu0 %v421
  %1603 = vmatprep.subr.mxu0 %v426
  %1604 = vmatpush1.msra.mxu0 %v425
  %1605 = vmatprep.subr.mxu0 %v430
  %1606 = vmatpush1.msra.mxu0 %v429
  %1607 = vmatprep.subr.mxu0 %v434
  %1608 = vmatpush1.msra.mxu0 %v433
  %1609 = vmatprep.subr.mxu0 %v438
  %1610 = vmatpush1.msra.mxu0 %v437
  %1611 = vmatprep.subr.mxu0 0.0
  %1612 = vmatpush1.msra.mxu0 0.0
  %1613 = vmatprep.subr.mxu0 0.0
  %1614 = vmatpush1.msra.mxu0 0.0
  %1615 = vmatprep.subr.mxu0 0.0
  %1616 = vmatpush1.msra.mxu0 0.0
  %1617 = vmatprep.subr.mxu0 0.0
  %1618 = vmatpush1.msra.mxu0 0.0
  %1619 = vmatprep.subr.mxu0 0.0
  %1620 = vmatpush1.msra.mxu0 0.0
  %1621 = vmatprep.subr.mxu0 0.0
  %1622 = vmatpush1.msra.mxu0 0.0
  %1623 = vmatprep.subr.mxu0 0.0
  %1624 = vmatpush1.msra.mxu0 0.0
  %1625 = vmatprep.subr.mxu0 0.0
  %1626 = vmatpush1.msra.mxu0 0.0
  %1627 = vmatprep.subr.mxu0 0.0
  %1628 = vmatpush1.msra.mxu0 0.0
  %1629 = vmatprep.subr.mxu0 0.0
  %1630 = vmatpush1.msra.mxu0 0.0
  %1631 = vmatprep.subr.mxu0 0.0
  %1632 = vmatpush1.msra.mxu0 0.0
  %1633 = vmatprep.subr.mxu0 0.0
  %1634 = vmatpush1.msra.mxu0 0.0
  %1635 = vmatprep.subr.mxu0 0.0
  %1636 = vmatpush1.msra.mxu0 0.0
  %1637 = vmatprep.subr.mxu0 0.0
  %1638 = vmatpush1.msra.mxu0 0.0
  %1639 = vmatprep.subr.mxu0 0.0
  %1640 = vmatpush1.msra.mxu0 0.0
  %1641 = vmatprep.subr.mxu0 0.0
  %1642 = vmatpush1.msra.mxu0 0.0
  %1643 = vmatprep.mubr.f32.mxu0 0.0
  %1644 = vmatmul.mubr.f32.gmra.mrb[0].mxu0 %v1500
  %v1645 = vpop.f32.mrb[0].mxu0
  %v1646 = vadd.f32 0.0, %v1645
  %v1647 = vpop.f32.mrb[0].mxu0
  %v1648 = vadd.f32 0.0, %v1647
  %1649 = vdwg.mxu0
  %v1650 = vadd.f32 %v1504, %v1575
  %v1651 = vadd.f32 %v1505, %v1577
  %v1652 = vadd.f32 %v1506, %v1646
  %v1653 = vadd.f32 %v1507, %v1648
  %v1654 = vxor.u32 %v1650, 2147483648
  %v1655 = vmul.f32 %v1654, 1.442695
  %v1656 = vpow.pop %v1655
  %v1657 = vadd.f32 %v1656, 1.0
  %v1658 = vrcp.pop %v1657
  %v1659 = vmul.f32 1.0, %v1658
  %v1660 = vxor.u32 %v1651, 2147483648
  %v1661 = vmul.f32 %v1660, 1.442695
  %v1662 = vpow.pop %v1661
  %v1663 = vadd.f32 %v1662, 1.0
  %v1664 = vrcp.pop %v1663
  %v1665 = vmul.f32 1.0, %v1664
  %v1666 = vtanh.pop %v1652
  %v1667 = vxor.u32 %v1653, 2147483648
  %v1668 = vmul.f32 %v1667, 1.442695
  %v1669 = vpow.pop %v1668
  %v1670 = vadd.f32 %v1669, 1.0
  %v1671 = vrcp.pop %v1670
  %v1672 = vmul.f32 1.0, %v1671
  %v1673 = vmul.f32 %v1665, %v1498
  %v1674 = vmul.f32 %v1659, %v1666
  %v1675 = vadd.f32 %v1673, %v1674
  %v1676 = vtanh.pop %v1675
  %v1677 = vmul.f32 %v1672, %v1676
  %s1678 = smul.u32 7, 4
  %s1679 = smul.addr %s1678, 8
  %s1680 = scalar_lea.vmem [#allocation2], %s1679
  %v1681 = vld [vmem:[%s1680] sm:$0xff]
  %v1682 = vld [vmem:[%s1680 + $0x8] sm:$0xff]
  %v1683 = vld [vmem:[%s1680 + $0x10] sm:$0xff]
  %v1684 = vld [vmem:[%s1680 + $0x18] sm:$0xff]
  %1685 = vmatprep.subr.mxu0 %v376
  %1686 = vmatpush1.msra.mxu0 %v375
  %1687 = vmatprep.subr.mxu0 %v380
  %1688 = vmatpush1.msra.mxu0 %v379
  %1689 = vmatprep.subr.mxu0 %v384
  %1690 = vmatpush1.msra.mxu0 %v383
  %1691 = vmatprep.subr.mxu0 %v388
  %1692 = vmatpush1.msra.mxu0 %v387
  %1693 = vmatprep.subr.mxu0 %v392
  %1694 = vmatpush1.msra.mxu0 %v391
  %1695 = vmatprep.subr.mxu0 %v396
  %1696 = vmatpush1.msra.mxu0 %v395
  %1697 = vmatprep.subr.mxu0 %v400
  %1698 = vmatpush1.msra.mxu0 %v399
  %1699 = vmatprep.subr.mxu0 %v404
  %1700 = vmatpush1.msra.mxu0 %v403
  %1701 = vmatprep.subr.mxu0 %v408
  %1702 = vmatpush1.msra.mxu0 %v407
  %1703 = vmatprep.subr.mxu0 %v412
  %1704 = vmatpush1.msra.mxu0 %v411
  %1705 = vmatprep.subr.mxu0 %v416
  %1706 = vmatpush1.msra.mxu0 %v415
  %1707 = vmatprep.subr.mxu0 %v420
  %1708 = vmatpush1.msra.mxu0 %v419
  %1709 = vmatprep.subr.mxu0 %v424
  %1710 = vmatpush1.msra.mxu0 %v423
  %1711 = vmatprep.subr.mxu0 %v428
  %1712 = vmatpush1.msra.mxu0 %v427
  %1713 = vmatprep.subr.mxu0 %v432
  %1714 = vmatpush1.msra.mxu0 %v431
  %1715 = vmatprep.subr.mxu0 %v436
  %1716 = vmatpush1.msra.mxu0 %v435
  %1717 = vmatprep.subr.mxu0 0.0
  %1718 = vmatpush1.msra.mxu0 0.0
  %1719 = vmatprep.subr.mxu0 0.0
  %1720 = vmatpush1.msra.mxu0 0.0
  %1721 = vmatprep.subr.mxu0 0.0
  %1722 = vmatpush1.msra.mxu0 0.0
  %1723 = vmatprep.subr.mxu0 0.0
  %1724 = vmatpush1.msra.mxu0 0.0
  %1725 = vmatprep.subr.mxu0 0.0
  %1726 = vmatpush1.msra.mxu0 0.0
  %1727 = vmatprep.subr.mxu0 0.0
  %1728 = vmatpush1.msra.mxu0 0.0
  %1729 = vmatprep.subr.mxu0 0.0
  %1730 = vmatpush1.msra.mxu0 0.0
  %1731 = vmatprep.subr.mxu0 0.0
  %1732 = vmatpush1.msra.mxu0 0.0
  %1733 = vmatprep.subr.mxu0 0.0
  %1734 = vmatpush1.msra.mxu0 0.0
  %1735 = vmatprep.subr.mxu0 0.0
  %1736 = vmatpush1.msra.mxu0 0.0
  %1737 = vmatprep.subr.mxu0 0.0
  %1738 = vmatpush1.msra.mxu0 0.0
  %1739 = vmatprep.subr.mxu0 0.0
  %1740 = vmatpush1.msra.mxu0 0.0
  %1741 = vmatprep.subr.mxu0 0.0
  %1742 = vmatpush1.msra.mxu0 0.0
  %1743 = vmatprep.subr.mxu0 0.0
  %1744 = vmatpush1.msra.mxu0 0.0
  %1745 = vmatprep.subr.mxu0 0.0
  %1746 = vmatpush1.msra.mxu0 0.0
  %1747 = vmatprep.subr.mxu0 0.0
  %1748 = vmatpush1.msra.mxu0 0.0
  %1749 = vmatprep.mubr.f32.mxu0 0.0
  %1750 = vmatmul.mubr.f32.gmra.mrb[0].mxu0 %v1677
  %v1751 = vpop.f32.mrb[0].mxu0
  %v1752 = vadd.f32 0.0, %v1751
  %v1753 = vpop.f32.mrb[0].mxu0
  %v1754 = vadd.f32 0.0, %v1753
  %1755 = vdwg.mxu0
  %1756 = vmatprep.subr.mxu0 %v378
  %1757 = vmatpush1.msra.mxu0 %v377
  %1758 = vmatprep.subr.mxu0 %v382
  %1759 = vmatpush1.msra.mxu0 %v381
  %1760 = vmatprep.subr.mxu0 %v386
  %1761 = vmatpush1.msra.mxu0 %v385
  %1762 = vmatprep.subr.mxu0 %v390
  %1763 = vmatpush1.msra.mxu0 %v389
  %1764 = vmatprep.subr.mxu0 %v394
  %1765 = vmatpush1.msra.mxu0 %v393
  %1766 = vmatprep.subr.mxu0 %v398
  %1767 = vmatpush1.msra.mxu0 %v397
  %1768 = vmatprep.subr.mxu0 %v402
  %1769 = vmatpush1.msra.mxu0 %v401
  %1770 = vmatprep.subr.mxu0 %v406
  %1771 = vmatpush1.msra.mxu0 %v405
  %1772 = vmatprep.subr.mxu0 %v410
  %1773 = vmatpush1.msra.mxu0 %v409
  %1774 = vmatprep.subr.mxu0 %v414
  %1775 = vmatpush1.msra.mxu0 %v413
  %1776 = vmatprep.subr.mxu0 %v418
  %1777 = vmatpush1.msra.mxu0 %v417
  %1778 = vmatprep.subr.mxu0 %v422
  %1779 = vmatpush1.msra.mxu0 %v421
  %1780 = vmatprep.subr.mxu0 %v426
  %1781 = vmatpush1.msra.mxu0 %v425
  %1782 = vmatprep.subr.mxu0 %v430
  %1783 = vmatpush1.msra.mxu0 %v429
  %1784 = vmatprep.subr.mxu0 %v434
  %1785 = vmatpush1.msra.mxu0 %v433
  %1786 = vmatprep.subr.mxu0 %v438
  %1787 = vmatpush1.msra.mxu0 %v437
  %1788 = vmatprep.subr.mxu0 0.0
  %1789 = vmatpush1.msra.mxu0 0.0
  %1790 = vmatprep.subr.mxu0 0.0
  %1791 = vmatpush1.msra.mxu0 0.0
  %1792 = vmatprep.subr.mxu0 0.0
  %1793 = vmatpush1.msra.mxu0 0.0
  %1794 = vmatprep.subr.mxu0 0.0
  %1795 = vmatpush1.msra.mxu0 0.0
  %1796 = vmatprep.subr.mxu0 0.0
  %1797 = vmatpush1.msra.mxu0 0.0
  %1798 = vmatprep.subr.mxu0 0.0
  %1799 = vmatpush1.msra.mxu0 0.0
  %1800 = vmatprep.subr.mxu0 0.0
  %1801 = vmatpush1.msra.mxu0 0.0
  %1802 = vmatprep.subr.mxu0 0.0
  %1803 = vmatpush1.msra.mxu0 0.0
  %1804 = vmatprep.subr.mxu0 0.0
  %1805 = vmatpush1.msra.mxu0 0.0
  %1806 = vmatprep.subr.mxu0 0.0
  %1807 = vmatpush1.msra.mxu0 0.0
  %1808 = vmatprep.subr.mxu0 0.0
  %1809 = vmatpush1.msra.mxu0 0.0
  %1810 = vmatprep.subr.mxu0 0.0
  %1811 = vmatpush1.msra.mxu0 0.0
  %1812 = vmatprep.subr.mxu0 0.0
  %1813 = vmatpush1.msra.mxu0 0.0
  %1814 = vmatprep.subr.mxu0 0.0
  %1815 = vmatpush1.msra.mxu0 0.0
  %1816 = vmatprep.subr.mxu0 0.0
  %1817 = vmatpush1.msra.mxu0 0.0
  %1818 = vmatprep.subr.mxu0 0.0
  %1819 = vmatpush1.msra.mxu0 0.0
  %1820 = vmatprep.mubr.f32.mxu0 0.0
  %1821 = vmatmul.mubr.f32.gmra.mrb[0].mxu0 %v1677
  %v1822 = vpop.f32.mrb[0].mxu0
  %v1823 = vadd.f32 0.0, %v1822
  %v1824 = vpop.f32.mrb[0].mxu0
  %v1825 = vadd.f32 0.0, %v1824
  %1826 = vdwg.mxu0
  %v1827 = vadd.f32 %v1681, %v1752
  %v1828 = vadd.f32 %v1682, %v1754
  %v1829 = vadd.f32 %v1683, %v1823
  %v1830 = vadd.f32 %v1684, %v1825
  %v1831 = vxor.u32 %v1827, 2147483648
  %v1832 = vmul.f32 %v1831, 1.442695
  %v1833 = vpow.pop %v1832
  %v1834 = vadd.f32 %v1833, 1.0
  %v1835 = vrcp.pop %v1834
  %v1836 = vmul.f32 1.0, %v1835
  %v1837 = vxor.u32 %v1828, 2147483648
  %v1838 = vmul.f32 %v1837, 1.442695
  %v1839 = vpow.pop %v1838
  %v1840 = vadd.f32 %v1839, 1.0
  %v1841 = vrcp.pop %v1840
  %v1842 = vmul.f32 1.0, %v1841
  %v1843 = vtanh.pop %v1829
  %v1844 = vxor.u32 %v1830, 2147483648
  %v1845 = vmul.f32 %v1844, 1.442695
  %v1846 = vpow.pop %v1845
  %v1847 = vadd.f32 %v1846, 1.0
  %v1848 = vrcp.pop %v1847
  %v1849 = vmul.f32 1.0, %v1848
  %v1850 = vmul.f32 %v1842, %v1675
  %v1851 = vmul.f32 %v1836, %v1843
  %v1852 = vadd.f32 %v1850, %v1851
  %v1853 = vtanh.pop %v1852
  %v1854 = vmul.f32 %v1849, %v1853
  %v1855 = vld [vmem:[%s4] sm:$0xff]
  %v1856 = vld [vmem:[%s4 + $0x8] sm:$0xff]
  %v1857 = vld [vmem:[%s4 + $0x10] sm:$0xff]
  %v1858 = vld [vmem:[%s4 + $0x18] sm:$0xff]
  %v1859 = vld [vmem:[%s4 + $0x20] sm:$0xff]
  %v1860 = vld [vmem:[%s4 + $0x28] sm:$0xff]
  %v1861 = vld [vmem:[%s4 + $0x30] sm:$0xff]
  %v1862 = vld [vmem:[%s4 + $0x38] sm:$0xff]
  %v1863 = vld [vmem:[%s4 + $0x40] sm:$0xff]
  %v1864 = vld [vmem:[%s4 + $0x48] sm:$0xff]
  %v1865 = vld [vmem:[%s4 + $0x50] sm:$0xff]
  %v1866 = vld [vmem:[%s4 + $0x58] sm:$0xff]
  %v1867 = vld [vmem:[%s4 + $0x60] sm:$0xff]
  %v1868 = vld [vmem:[%s4 + $0x68] sm:$0xff]
  %v1869 = vld [vmem:[%s4 + $0x70] sm:$0xff]
  %v1870 = vld [vmem:[%s4 + $0x78] sm:$0xff]
  %v1871 = vld [vmem:[%s5] sm:$0x1]
  %v1873 = vlaneseq
  %v1874 = vshrl.u32 %v1873, 7
  %v1875 = vsub.s32 0, %v1874
  %v1876 = vrot.slane %v1871, %v1875
  %1878 = vmatprep.subr.mxu0 0.0
  %1879 = vmatpush1.msra.mxu0 %v1855
  %1880 = vmatprep.subr.mxu0 0.0
  %1881 = vmatpush1.msra.mxu0 %v1856
  %1882 = vmatprep.subr.mxu0 0.0
  %1883 = vmatpush1.msra.mxu0 %v1857
  %1884 = vmatprep.subr.mxu0 0.0
  %1885 = vmatpush1.msra.mxu0 %v1858
  %1886 = vmatprep.subr.mxu0 0.0
  %1887 = vmatpush1.msra.mxu0 %v1859
  %1888 = vmatprep.subr.mxu0 0.0
  %1889 = vmatpush1.msra.mxu0 %v1860
  %1890 = vmatprep.subr.mxu0 0.0
  %1891 = vmatpush1.msra.mxu0 %v1861
  %1892 = vmatprep.subr.mxu0 0.0
  %1893 = vmatpush1.msra.mxu0 %v1862
  %1894 = vmatprep.subr.mxu0 0.0
  %1895 = vmatpush1.msra.mxu0 %v1863
  %1896 = vmatprep.subr.mxu0 0.0
  %1897 = vmatpush1.msra.mxu0 %v1864
  %1898 = vmatprep.subr.mxu0 0.0
  %1899 = vmatpush1.msra.mxu0 %v1865
  %1900 = vmatprep.subr.mxu0 0.0
  %1901 = vmatpush1.msra.mxu0 %v1866
  %1902 = vmatprep.subr.mxu0 0.0
  %1903 = vmatpush1.msra.mxu0 %v1867
  %1904 = vmatprep.subr.mxu0 0.0
  %1905 = vmatpush1.msra.mxu0 %v1868
  %1906 = vmatprep.subr.mxu0 0.0
  %1907 = vmatpush1.msra.mxu0 %v1869
  %1908 = vmatprep.subr.mxu0 0.0
  %1909 = vmatpush1.msra.mxu0 %v1870
  %1910 = vmatprep.subr.mxu0 0.0
  %1911 = vmatpush1.msra.mxu0 0.0
  %1912 = vmatprep.subr.mxu0 0.0
  %1913 = vmatpush1.msra.mxu0 0.0
  %1914 = vmatprep.subr.mxu0 0.0
  %1915 = vmatpush1.msra.mxu0 0.0
  %1916 = vmatprep.subr.mxu0 0.0
  %1917 = vmatpush1.msra.mxu0 0.0
  %1918 = vmatprep.subr.mxu0 0.0
  %1919 = vmatpush1.msra.mxu0 0.0
  %1920 = vmatprep.subr.mxu0 0.0
  %1921 = vmatpush1.msra.mxu0 0.0
  %1922 = vmatprep.subr.mxu0 0.0
  %1923 = vmatpush1.msra.mxu0 0.0
  %1924 = vmatprep.subr.mxu0 0.0
  %1925 = vmatpush1.msra.mxu0 0.0
  %1926 = vmatprep.subr.mxu0 0.0
  %1927 = vmatpush1.msra.mxu0 0.0
  %1928 = vmatprep.subr.mxu0 0.0
  %1929 = vmatpush1.msra.mxu0 0.0
  %1930 = vmatprep.subr.mxu0 0.0
  %1931 = vmatpush1.msra.mxu0 0.0
  %1932 = vmatprep.subr.mxu0 0.0
  %1933 = vmatpush1.msra.mxu0 0.0
  %1934 = vmatprep.subr.mxu0 0.0
  %1935 = vmatpush1.msra.mxu0 0.0
  %1936 = vmatprep.subr.mxu0 0.0
  %1937 = vmatpush1.msra.mxu0 0.0
  %1938 = vmatprep.subr.mxu0 0.0
  %1939 = vmatpush1.msra.mxu0 0.0
  %1940 = vmatprep.subr.mxu0 0.0
  %1941 = vmatpush1.msra.mxu0 0.0
  %1942 = vmatprep.mubr.f32.mxu0 0.0
  %1943 = vmatmul.mubr.f32.gmra.mrb[0].mxu0 %v1854
  %v1944 = vpop.f32.mrb[0].mxu0
  %v1945 = vadd.f32 %v1876, %v1944
  %v1946 = vpop.f32.mrb[0].mxu0
  %1947 = vdwg.mxu0
  %1948 = vst [vmem:[%s6] sm:$0xff] %v1945
  // Predicated region
  $region26: #{my_lstm_model_forward.1} parent=0 // pred_check
    _
  $region27: #{my_lstm_model_forward.1} parent=0 // pred_check_branch
    %1950 = sbr.rel (0) target = $region29
  $region28: #{my_lstm_model_forward.1} parent=0 // pred_region
    _
  $region29: #{my_lstm_model_forward.1} parent=0 // pred_fallthru
    _
  // Predicated region
  $region30: #{my_lstm_model_forward.1} parent=0 // pred_check
    _
  $region31: #{my_lstm_model_forward.1} parent=0 // pred_check_branch
    %1952 = sbr.rel (0) target = $region33
  $region32: #{my_lstm_model_forward.1} parent=0 // pred_region
    _
  $region33: #{my_lstm_model_forward.1} parent=0 // pred_fallthru
    _

</llo_original>
